<compile_context>
chip_gen: v7x
topology: tpu7x:2x2x1
jax: 0.10.0
libtpu: 0.0.40
codegen_flags: <defaults>
</compile_context>

<pallas_src>
import numpy as np
import jax
import jax.numpy as jnp
from jax import lax
from jax.experimental import pallas as pl
from jax.experimental.pallas import tpu as pltpu

# ---------------- model hyper-params (small, consistent with the module) ----
NUM_C = 16
NUM_RGAP = 4
NUM_SGAP = 5
NUM_PCOUNT = 6
NTOTAL = NUM_RGAP + NUM_SGAP + NUM_PCOUNT          # 15
EMB = 32                                            # emb_size == hidden_size
HID = EMB
H4 = 4 * HID                                        # fused gate width = 128 lanes
LSTM_IN = EMB + NTOTAL                              # 47
OUTP = 128                                          # lane-dense padded output width
T, B = 8, 2                                         # seq (axis 0), batch (axis 1)


# ---------------------------- fused Pallas kernel ----------------------------
def dkt_fused_kernel(xemb_ref, cct1_ref, xprojct_ref, cct2_ref, outct_ref,
                     wihx_ref, whh_ref, b_ref, wouth_ref, bout_ref,
                     y_ref, hseq_sc):
    # ---- CIntegration #1 + hoisted LSTM input projection (one batched matmul)
    theta1 = xemb_ref[...] * cct1_ref[...]                             # [N, E]
    xproj = (jnp.dot(theta1, wihx_ref[...],
                     preferred_element_type=jnp.float32)
             + xprojct_ref[...] + b_ref[...])                          # [N, 4H]

    # ---- LSTM recurrence: only h_prev @ Whh_fused on the sequential path
    whh = whh_ref[...]                                                 # [H, 4H]
    h = jnp.zeros((B, HID), jnp.float32)
    c = jnp.zeros((B, HID), jnp.float32)
    for t in range(T):                                                 # static unroll
        g = xproj[t * B:(t + 1) * B, :] + jnp.dot(
            h, whh, preferred_element_type=jnp.float32)                # [B, 4H]
        i_g = jax.nn.sigmoid(g[:, 0:HID])
        f_g = jax.nn.sigmoid(g[:, HID:2 * HID])
        g_g = jnp.tanh(g[:, 2 * HID:3 * HID])
        o_g = jax.nn.sigmoid(g[:, 3 * HID:4 * HID])
        c = f_g * c + i_g * g_g
        h = o_g * jnp.tanh(c)
        hseq_sc[t * B:(t + 1) * B, :] = h                              # collect h_t

    # ---- CIntegration #2 + dropout(identity) + out Linear + sigmoid
    # (ct2 @ Wout_ct already folded into the gathered `outct` input)
    theta2 = hseq_sc[...] * cct2_ref[...]                              # [N, H]
    logits = (jnp.dot(theta2, wouth_ref[...],
                      preferred_element_type=jnp.float32)
              + outct_ref[...] + bout_ref[...])                        # [N, 128]
    y_ref[...] = jax.nn.sigmoid(logits)


def dkt_fused_call(xemb, cct1, xproj_ct, cct2, outct,
                   wih_x, whh, b, wout_h_pad, bout_pad):
    n = xemb.shape[0]
    return pl.pallas_call(
        dkt_fused_kernel,
        out_shape=jax.ShapeDtypeStruct((n, OUTP), jnp.float32),
        grid=(1,),
        in_specs=[pl.BlockSpec((n, EMB), lambda i: (0, 0)),     # xemb
                  pl.BlockSpec((n, EMB), lambda i: (0, 0)),     # cct1
                  pl.BlockSpec((n, H4), lambda i: (0, 0)),      # xproj_ct
                  pl.BlockSpec((n, EMB), lambda i: (0, 0)),     # cct2
                  pl.BlockSpec((n, OUTP), lambda i: (0, 0)),    # outct (padded)
                  pl.BlockSpec((EMB, H4), lambda i: (0, 0)),    # Wih_x fused
                  pl.BlockSpec((HID, H4), lambda i: (0, 0)),    # Whh fused
                  pl.BlockSpec((1, H4), lambda i: (0, 0)),      # bias fused
                  pl.BlockSpec((HID, OUTP), lambda i: (0, 0)),  # Wout_h (padded)
                  pl.BlockSpec((1, OUTP), lambda i: (0, 0))],   # bout (padded)
        out_specs=pl.BlockSpec((n, OUTP), lambda i: (0, 0)),
        scratch_shapes=[pltpu.VMEM((n, HID), jnp.float32)],     # h sequence
        compiler_params=pltpu.CompilerParams(
            dimension_semantics=("arbitrary",)),
    )(xemb, cct1, xproj_ct, cct2, outct, wih_x, whh, b, wout_h_pad, bout_pad)


# --------------------------- full forward (glue + kernel) --------------------
def _gap_gather(table, rgap, sgap, pcount):
    # equivalent to one_hot(concat(rgap,sgap,pcount)) @ table, as 3 row gathers
    return (table[rgap]
            + table[NUM_RGAP + sgap]
            + table[NUM_RGAP + NUM_SGAP + pcount])


@jax.jit
def dkt_forget_forward(q, r, dgaps, P):
    t, b = q.shape
    n = t * b

    # split/pack fused parameters for the kernel
    wih_x = P['wih'][:EMB]                                    # [EMB, 4H]
    wih_ct = P['wih'][EMB:]                                   # [NTOTAL, 4H]
    wout_h_pad = jnp.pad(P['wout_h'], ((0, 0), (0, OUTP - NUM_C)))
    wout_ct_pad = jnp.pad(P['wout_ct'], ((0, 0), (0, OUTP - NUM_C)))
    bout_pad = jnp.pad(P['bout'], ((0, 0), (0, OUTP - NUM_C)))

    # glue: embedding lookup + gap-table row gathers (no one-hot materialization)
    x = q + NUM_C * r
    xemb = P['emb'][x]                                                        # [T,B,E]
    cct1 = _gap_gather(P['wc'], dgaps['rgaps'], dgaps['sgaps'], dgaps['pcounts'])         # [T,B,E]
    xproj_ct = _gap_gather(wih_ct, dgaps['rgaps'], dgaps['sgaps'], dgaps['pcounts'])      # [T,B,4H]
    cct2 = _gap_gather(P['wc'], dgaps['shft_rgaps'], dgaps['shft_sgaps'], dgaps['shft_pcounts'])       # [T,B,E]
    outct = _gap_gather(wout_ct_pad, dgaps['shft_rgaps'], dgaps['shft_sgaps'], dgaps['shft_pcounts'])  # [T,B,128]

    y_pad = dkt_fused_call(xemb.reshape(n, EMB), cct1.reshape(n, EMB),
                           xproj_ct.reshape(n, H4), cct2.reshape(n, EMB),
                           outct.reshape(n, OUTP),
                           wih_x, P['whh'], P['b'], wout_h_pad, bout_pad)
    return y_pad[:, :NUM_C].reshape(t, b, NUM_C)


# --------------------------- pure-JAX reference ------------------------------
def make_ct(rgap, sgap, pcount):
    return jnp.concatenate([jax.nn.one_hot(rgap, NUM_RGAP, dtype=jnp.float32),
                            jax.nn.one_hot(sgap, NUM_SGAP, dtype=jnp.float32),
                            jax.nn.one_hot(pcount, NUM_PCOUNT, dtype=jnp.float32)],
                           axis=-1)


def reference_forward(q, r, dgaps, P):
    x = q + NUM_C * r
    xemb = P['emb'][x]
    ct1 = make_ct(dgaps['rgaps'], dgaps['sgaps'], dgaps['pcounts'])
    theta_in = jnp.concatenate([xemb * (ct1 @ P['wc']), ct1], -1)     # [T,B,LSTM_IN]

    def step(carry, xt):
        h, c = carry
        g = xt @ P['wih'] + h @ P['whh'] + P['b'][0]
        i = jax.nn.sigmoid(g[:, :HID])
        f = jax.nn.sigmoid(g[:, HID:2 * HID])
        gg = jnp.tanh(g[:, 2 * HID:3 * HID])
        o = jax.nn.sigmoid(g[:, 3 * HID:])
        c = f * c + i * gg
        h = o * jnp.tanh(c)
        return (h, c), h

    h0 = jnp.zeros((q.shape[1], HID), jnp.float32)
    _, hs = lax.scan(step, (h0, h0), theta_in)                        # [T,B,H]

    ct2 = make_ct(dgaps['shft_rgaps'], dgaps['shft_sgaps'], dgaps['shft_pcounts'])
    theta2 = hs * (ct2 @ P['wc'])
    logits = theta2 @ P['wout_h'] + ct2 @ P['wout_ct'] + P['bout']
    return jax.nn.sigmoid(logits)


# ------------------------------------ main -----------------------------------
if __name__ == "__main__":
    key = jax.random.PRNGKey(0)
    ks = jax.random.split(key, 12)

    # deterministic synthetic parameters (fused-gate layout, gate order i|f|g|o)
    P = {
        'emb':     0.1 * jax.random.normal(ks[0], (2 * NUM_C, EMB), jnp.float32),
        'wc':      0.1 * jax.random.normal(ks[1], (NTOTAL, EMB), jnp.float32),     # cemb.weight.T
        'wih':     0.1 * jax.random.normal(ks[2], (LSTM_IN, H4), jnp.float32),     # fused W_ih.T, cols [i|f|g|o]
        'whh':     0.1 * jax.random.normal(ks[3], (HID, H4), jnp.float32),         # fused W_hh.T
        'b':       0.1 * jax.random.normal(ks[4], (1, H4), jnp.float32),           # b_ih + b_hh, fused
        'wout_h':  0.1 * jax.random.normal(ks[5], (HID, NUM_C), jnp.float32),      # out_layer.weight[:, :H].T
        'wout_ct': 0.1 * jax.random.normal(ks[6], (NTOTAL, NUM_C), jnp.float32),   # out_layer.weight[:, H:].T
        'bout':    0.1 * jax.random.normal(ks[7], (1, NUM_C), jnp.float32),
    }

    # deterministic synthetic inputs ([T, B] = sequence-first)
    q = jax.random.randint(ks[8], (T, B), 0, NUM_C, dtype=jnp.int32)
    r = jax.random.randint(ks[9], (T, B), 0, 2, dtype=jnp.int32)
    gk = jax.random.split(ks[10], 6)
    dgaps = {
        'rgaps':        jax.random.randint(gk[0], (T, B), 0, NUM_RGAP, dtype=jnp.int32),
        'sgaps':        jax.random.randint(gk[1], (T, B), 0, NUM_SGAP, dtype=jnp.int32),
        'pcounts':      jax.random.randint(gk[2], (T, B), 0, NUM_PCOUNT, dtype=jnp.int32),
        'shft_rgaps':   jax.random.randint(gk[3], (T, B), 0, NUM_RGAP, dtype=jnp.int32),
        'shft_sgaps':   jax.random.randint(gk[4], (T, B), 0, NUM_SGAP, dtype=jnp.int32),
        'shft_pcounts': jax.random.randint(gk[5], (T, B), 0, NUM_PCOUNT, dtype=jnp.int32),
    }

    y = jax.block_until_ready(dkt_forget_forward(q, r, dgaps, P))
    y_ref = jax.block_until_ready(reference_forward(q, r, dgaps, P))

    assert y.shape == (T, B, NUM_C) and y.dtype == jnp.float32
    np.testing.assert_allclose(np.asarray(y), np.asarray(y_ref), atol=1e-3, rtol=1e-3)
    print("KERNEL_OK")
</pallas_src>

<mosaic_0001>
module attributes {stable_mosaic.version = 11 : i64} {
  func.func @dkt_fused_kernel(%arg0: i32, %arg1: memref<16x32xf32, #tpu.memory_space<vmem>>, %arg2: memref<16x32xf32, #tpu.memory_space<vmem>>, %arg3: memref<16x128xf32, #tpu.memory_space<vmem>>, %arg4: memref<16x32xf32, #tpu.memory_space<vmem>>, %arg5: memref<16x128xf32, #tpu.memory_space<vmem>>, %arg6: memref<32x128xf32, #tpu.memory_space<vmem>>, %arg7: memref<32x128xf32, #tpu.memory_space<vmem>>, %arg8: memref<1x128xf32, #tpu.memory_space<vmem>>, %arg9: memref<32x128xf32, #tpu.memory_space<vmem>>, %arg10: memref<1x128xf32, #tpu.memory_space<vmem>>, %arg11: memref<16x128xf32, #tpu.memory_space<vmem>>, %arg12: memref<16x32xf32, #tpu.memory_space<vmem>>) attributes {dimension_semantics = [#tpu.dimension_semantics<arbitrary>], iteration_bounds = array<i64: 1>, scalar_prefetch = 0 : i64, scratch_operands = 1 : i64, tpu.core_type = #tpu.core_type<tc>, window_params = [{pipeline_mode = #tpu.pipeline_mode<synchronous>, transform_indices = @transform_0, window_bounds = array<i64: 16, 32>}, {pipeline_mode = #tpu.pipeline_mode<synchronous>, transform_indices = @transform_1, window_bounds = array<i64: 16, 32>}, {pipeline_mode = #tpu.pipeline_mode<synchronous>, transform_indices = @transform_2, window_bounds = array<i64: 16, 128>}, {pipeline_mode = #tpu.pipeline_mode<synchronous>, transform_indices = @transform_3, window_bounds = array<i64: 16, 32>}, {pipeline_mode = #tpu.pipeline_mode<synchronous>, transform_indices = @transform_4, window_bounds = array<i64: 16, 128>}, {pipeline_mode = #tpu.pipeline_mode<synchronous>, transform_indices = @transform_5, window_bounds = array<i64: 32, 128>}, {pipeline_mode = #tpu.pipeline_mode<synchronous>, transform_indices = @transform_6, window_bounds = array<i64: 32, 128>}, {pipeline_mode = #tpu.pipeline_mode<synchronous>, transform_indices = @transform_7, window_bounds = array<i64: 1, 128>}, {pipeline_mode = #tpu.pipeline_mode<synchronous>, transform_indices = @transform_8, window_bounds = array<i64: 32, 128>}, {pipeline_mode = #tpu.pipeline_mode<synchronous>, transform_indices = @transform_9, window_bounds = array<i64: 1, 128>}, {pipeline_mode = #tpu.pipeline_mode<synchronous>, transform_indices = @transform_10, window_bounds = array<i64: 16, 128>}]} {
    %c0 = arith.constant 0 : index
    %c0_0 = arith.constant 0 : index
    %0 = vector.load %arg1[%c0, %c0_0] : memref<16x32xf32, #tpu.memory_space<vmem>>, vector<16x32xf32>
    %c0_1 = arith.constant 0 : index
    %c0_2 = arith.constant 0 : index
    %1 = vector.load %arg2[%c0_1, %c0_2] : memref<16x32xf32, #tpu.memory_space<vmem>>, vector<16x32xf32>
    %2 = arith.mulf %0, %1 : vector<16x32xf32>
    %c0_3 = arith.constant 0 : index
    %c0_4 = arith.constant 0 : index
    %3 = vector.load %arg6[%c0_3, %c0_4] : memref<32x128xf32, #tpu.memory_space<vmem>>, vector<32x128xf32>
    %cst = arith.constant dense<0.000000e+00> : vector<16x128xf32>
    %4 = tpu.matmul %2, %3, %cst {dimension_numbers = #tpu.dot_dimension_numbers<[1], [0], [0], [1], [0, 0, 1, 1], [], []>} : vector<16x32xf32>, vector<32x128xf32>, vector<16x128xf32> -> vector<16x128xf32>
    %c0_5 = arith.constant 0 : index
    %c0_6 = arith.constant 0 : index
    %5 = vector.load %arg3[%c0_5, %c0_6] : memref<16x128xf32, #tpu.memory_space<vmem>>, vector<16x128xf32>
    %6 = arith.addf %4, %5 : vector<16x128xf32>
    %c0_7 = arith.constant 0 : index
    %c0_8 = arith.constant 0 : index
    %7 = vector.load %arg8[%c0_7, %c0_8] : memref<1x128xf32, #tpu.memory_space<vmem>>, vector<1x128xf32>
    %8 = vector.broadcast %7 : vector<1x128xf32> to vector<16x128xf32>
    %9 = arith.addf %6, %8 : vector<16x128xf32>
    %c0_9 = arith.constant 0 : index
    %c0_10 = arith.constant 0 : index
    %10 = vector.load %arg7[%c0_9, %c0_10] : memref<32x128xf32, #tpu.memory_space<vmem>>, vector<32x128xf32>
    %cst_11 = arith.constant 0.000000e+00 : f32
    %11 = vector.broadcast %cst_11 : f32 to vector<2x32xf32>
    %cst_12 = arith.constant 0.000000e+00 : f32
    %12 = vector.broadcast %cst_12 : f32 to vector<2x32xf32>
    %13 = vector.extract_strided_slice %9 {offsets = [0, 0], sizes = [2, 128], strides = [1, 1]} : vector<16x128xf32> to vector<2x128xf32>
    %cst_13 = arith.constant dense<0.000000e+00> : vector<2x128xf32>
    %14 = tpu.matmul %11, %10, %cst_13 {dimension_numbers = #tpu.dot_dimension_numbers<[1], [0], [0], [1], [0, 0, 1, 1], [], []>} : vector<2x32xf32>, vector<32x128xf32>, vector<2x128xf32> -> vector<2x128xf32>
    %15 = arith.addf %13, %14 : vector<2x128xf32>
    %16 = vector.extract_strided_slice %15 {offsets = [0, 0], sizes = [2, 32], strides = [1, 1]} : vector<2x128xf32> to vector<2x32xf32>
    %17 = arith.negf %16 : vector<2x32xf32>
    %18 = math.exp %17 : vector<2x32xf32>
    %cst_14 = arith.constant 1.000000e+00 : f32
    %19 = vector.broadcast %cst_14 : f32 to vector<2x32xf32>
    %20 = arith.addf %19, %18 : vector<2x32xf32>
    %21 = arith.divf %19, %20 : vector<2x32xf32>
    %22 = vector.extract_strided_slice %15 {offsets = [0, 32], sizes = [2, 32], strides = [1, 1]} : vector<2x128xf32> to vector<2x32xf32>
    %23 = arith.negf %22 : vector<2x32xf32>
    %24 = math.exp %23 : vector<2x32xf32>
    %cst_15 = arith.constant 1.000000e+00 : f32
    %25 = vector.broadcast %cst_15 : f32 to vector<2x32xf32>
    %26 = arith.addf %25, %24 : vector<2x32xf32>
    %27 = arith.divf %25, %26 : vector<2x32xf32>
    %28 = vector.extract_strided_slice %15 {offsets = [0, 64], sizes = [2, 32], strides = [1, 1]} : vector<2x128xf32> to vector<2x32xf32>
    %29 = math.tanh %28 : vector<2x32xf32>
    %30 = vector.extract_strided_slice %15 {offsets = [0, 96], sizes = [2, 32], strides = [1, 1]} : vector<2x128xf32> to vector<2x32xf32>
    %31 = arith.negf %30 : vector<2x32xf32>
    %32 = math.exp %31 : vector<2x32xf32>
    %cst_16 = arith.constant 1.000000e+00 : f32
    %33 = vector.broadcast %cst_16 : f32 to vector<2x32xf32>
    %34 = arith.addf %33, %32 : vector<2x32xf32>
    %35 = arith.divf %33, %34 : vector<2x32xf32>
    %36 = arith.mulf %27, %12 : vector<2x32xf32>
    %37 = arith.mulf %21, %29 : vector<2x32xf32>
    %38 = arith.addf %36, %37 : vector<2x32xf32>
    %39 = math.tanh %38 : vector<2x32xf32>
    %40 = arith.mulf %35, %39 : vector<2x32xf32>
    %c0_17 = arith.constant 0 : index
    %c0_18 = arith.constant 0 : index
    %41 = vector.load %arg12[%c0_17, %c0_18] : memref<16x32xf32, #tpu.memory_space<vmem>>, vector<2x32xf32>
    tpu.vector_store %arg12[%c0_17, %c0_18], %40 {strides = array<i32>} : memref<16x32xf32, #tpu.memory_space<vmem>>, vector<2x32xf32>,
    %42 = vector.extract_strided_slice %9 {offsets = [2, 0], sizes = [2, 128], strides = [1, 1]} : vector<16x128xf32> to vector<2x128xf32>
    %cst_19 = arith.constant dense<0.000000e+00> : vector<2x128xf32>
    %43 = tpu.matmul %40, %10, %cst_19 {dimension_numbers = #tpu.dot_dimension_numbers<[1], [0], [0], [1], [0, 0, 1, 1], [], []>} : vector<2x32xf32>, vector<32x128xf32>, vector<2x128xf32> -> vector<2x128xf32>
    %44 = arith.addf %42, %43 : vector<2x128xf32>
    %45 = vector.extract_strided_slice %44 {offsets = [0, 0], sizes = [2, 32], strides = [1, 1]} : vector<2x128xf32> to vector<2x32xf32>
    %46 = arith.negf %45 : vector<2x32xf32>
    %47 = math.exp %46 : vector<2x32xf32>
    %cst_20 = arith.constant 1.000000e+00 : f32
    %48 = vector.broadcast %cst_20 : f32 to vector<2x32xf32>
    %49 = arith.addf %48, %47 : vector<2x32xf32>
    %50 = arith.divf %48, %49 : vector<2x32xf32>
    %51 = vector.extract_strided_slice %44 {offsets = [0, 32], sizes = [2, 32], strides = [1, 1]} : vector<2x128xf32> to vector<2x32xf32>
    %52 = arith.negf %51 : vector<2x32xf32>
    %53 = math.exp %52 : vector<2x32xf32>
    %cst_21 = arith.constant 1.000000e+00 : f32
    %54 = vector.broadcast %cst_21 : f32 to vector<2x32xf32>
    %55 = arith.addf %54, %53 : vector<2x32xf32>
    %56 = arith.divf %54, %55 : vector<2x32xf32>
    %57 = vector.extract_strided_slice %44 {offsets = [0, 64], sizes = [2, 32], strides = [1, 1]} : vector<2x128xf32> to vector<2x32xf32>
    %58 = math.tanh %57 : vector<2x32xf32>
    %59 = vector.extract_strided_slice %44 {offsets = [0, 96], sizes = [2, 32], strides = [1, 1]} : vector<2x128xf32> to vector<2x32xf32>
    %60 = arith.negf %59 : vector<2x32xf32>
    %61 = math.exp %60 : vector<2x32xf32>
    %cst_22 = arith.constant 1.000000e+00 : f32
    %62 = vector.broadcast %cst_22 : f32 to vector<2x32xf32>
    %63 = arith.addf %62, %61 : vector<2x32xf32>
    %64 = arith.divf %62, %63 : vector<2x32xf32>
    %65 = arith.mulf %56, %38 : vector<2x32xf32>
    %66 = arith.mulf %50, %58 : vector<2x32xf32>
    %67 = arith.addf %65, %66 : vector<2x32xf32>
    %68 = math.tanh %67 : vector<2x32xf32>
    %69 = arith.mulf %64, %68 : vector<2x32xf32>
    %c2 = arith.constant 2 : index
    %c0_23 = arith.constant 0 : index
    %70 = vector.load %arg12[%c2, %c0_23] : memref<16x32xf32, #tpu.memory_space<vmem>>, vector<2x32xf32>
    tpu.vector_store %arg12[%c2, %c0_23], %69 {strides = array<i32>} : memref<16x32xf32, #tpu.memory_space<vmem>>, vector<2x32xf32>,
    %71 = vector.extract_strided_slice %9 {offsets = [4, 0], sizes = [2, 128], strides = [1, 1]} : vector<16x128xf32> to vector<2x128xf32>
    %cst_24 = arith.constant dense<0.000000e+00> : vector<2x128xf32>
    %72 = tpu.matmul %69, %10, %cst_24 {dimension_numbers = #tpu.dot_dimension_numbers<[1], [0], [0], [1], [0, 0, 1, 1], [], []>} : vector<2x32xf32>, vector<32x128xf32>, vector<2x128xf32> -> vector<2x128xf32>
    %73 = arith.addf %71, %72 : vector<2x128xf32>
    %74 = vector.extract_strided_slice %73 {offsets = [0, 0], sizes = [2, 32], strides = [1, 1]} : vector<2x128xf32> to vector<2x32xf32>
    %75 = arith.negf %74 : vector<2x32xf32>
    %76 = math.exp %75 : vector<2x32xf32>
    %cst_25 = arith.constant 1.000000e+00 : f32
    %77 = vector.broadcast %cst_25 : f32 to vector<2x32xf32>
    %78 = arith.addf %77, %76 : vector<2x32xf32>
    %79 = arith.divf %77, %78 : vector<2x32xf32>
    %80 = vector.extract_strided_slice %73 {offsets = [0, 32], sizes = [2, 32], strides = [1, 1]} : vector<2x128xf32> to vector<2x32xf32>
    %81 = arith.negf %80 : vector<2x32xf32>
    %82 = math.exp %81 : vector<2x32xf32>
    %cst_26 = arith.constant 1.000000e+00 : f32
    %83 = vector.broadcast %cst_26 : f32 to vector<2x32xf32>
    %84 = arith.addf %83, %82 : vector<2x32xf32>
    %85 = arith.divf %83, %84 : vector<2x32xf32>
    %86 = vector.extract_strided_slice %73 {offsets = [0, 64], sizes = [2, 32], strides = [1, 1]} : vector<2x128xf32> to vector<2x32xf32>
    %87 = math.tanh %86 : vector<2x32xf32>
    %88 = vector.extract_strided_slice %73 {offsets = [0, 96], sizes = [2, 32], strides = [1, 1]} : vector<2x128xf32> to vector<2x32xf32>
    %89 = arith.negf %88 : vector<2x32xf32>
    %90 = math.exp %89 : vector<2x32xf32>
    %cst_27 = arith.constant 1.000000e+00 : f32
    %91 = vector.broadcast %cst_27 : f32 to vector<2x32xf32>
    %92 = arith.addf %91, %90 : vector<2x32xf32>
    %93 = arith.divf %91, %92 : vector<2x32xf32>
    %94 = arith.mulf %85, %67 : vector<2x32xf32>
    %95 = arith.mulf %79, %87 : vector<2x32xf32>
    %96 = arith.addf %94, %95 : vector<2x32xf32>
    %97 = math.tanh %96 : vector<2x32xf32>
    %98 = arith.mulf %93, %97 : vector<2x32xf32>
    %c4 = arith.constant 4 : index
    %c0_28 = arith.constant 0 : index
    %99 = vector.load %arg12[%c4, %c0_28] : memref<16x32xf32, #tpu.memory_space<vmem>>, vector<2x32xf32>
    tpu.vector_store %arg12[%c4, %c0_28], %98 {strides = array<i32>} : memref<16x32xf32, #tpu.memory_space<vmem>>, vector<2x32xf32>,
    %100 = vector.extract_strided_slice %9 {offsets = [6, 0], sizes = [2, 128], strides = [1, 1]} : vector<16x128xf32> to vector<2x128xf32>
    %cst_29 = arith.constant dense<0.000000e+00> : vector<2x128xf32>
    %101 = tpu.matmul %98, %10, %cst_29 {dimension_numbers = #tpu.dot_dimension_numbers<[1], [0], [0], [1], [0, 0, 1, 1], [], []>} : vector<2x32xf32>, vector<32x128xf32>, vector<2x128xf32> -> vector<2x128xf32>
    %102 = arith.addf %100, %101 : vector<2x128xf32>
    %103 = vector.extract_strided_slice %102 {offsets = [0, 0], sizes = [2, 32], strides = [1, 1]} : vector<2x128xf32> to vector<2x32xf32>
    %104 = arith.negf %103 : vector<2x32xf32>
    %105 = math.exp %104 : vector<2x32xf32>
    %cst_30 = arith.constant 1.000000e+00 : f32
    %106 = vector.broadcast %cst_30 : f32 to vector<2x32xf32>
    %107 = arith.addf %106, %105 : vector<2x32xf32>
    %108 = arith.divf %106, %107 : vector<2x32xf32>
    %109 = vector.extract_strided_slice %102 {offsets = [0, 32], sizes = [2, 32], strides = [1, 1]} : vector<2x128xf32> to vector<2x32xf32>
    %110 = arith.negf %109 : vector<2x32xf32>
    %111 = math.exp %110 : vector<2x32xf32>
    %cst_31 = arith.constant 1.000000e+00 : f32
    %112 = vector.broadcast %cst_31 : f32 to vector<2x32xf32>
    %113 = arith.addf %112, %111 : vector<2x32xf32>
    %114 = arith.divf %112, %113 : vector<2x32xf32>
    %115 = vector.extract_strided_slice %102 {offsets = [0, 64], sizes = [2, 32], strides = [1, 1]} : vector<2x128xf32> to vector<2x32xf32>
    %116 = math.tanh %115 : vector<2x32xf32>
    %117 = vector.extract_strided_slice %102 {offsets = [0, 96], sizes = [2, 32], strides = [1, 1]} : vector<2x128xf32> to vector<2x32xf32>
    %118 = arith.negf %117 : vector<2x32xf32>
    %119 = math.exp %118 : vector<2x32xf32>
    %cst_32 = arith.constant 1.000000e+00 : f32
    %120 = vector.broadcast %cst_32 : f32 to vector<2x32xf32>
    %121 = arith.addf %120, %119 : vector<2x32xf32>
    %122 = arith.divf %120, %121 : vector<2x32xf32>
    %123 = arith.mulf %114, %96 : vector<2x32xf32>
    %124 = arith.mulf %108, %116 : vector<2x32xf32>
    %125 = arith.addf %123, %124 : vector<2x32xf32>
    %126 = math.tanh %125 : vector<2x32xf32>
    %127 = arith.mulf %122, %126 : vector<2x32xf32>
    %c6 = arith.constant 6 : index
    %c0_33 = arith.constant 0 : index
    %128 = vector.load %arg12[%c6, %c0_33] : memref<16x32xf32, #tpu.memory_space<vmem>>, vector<2x32xf32>
    tpu.vector_store %arg12[%c6, %c0_33], %127 {strides = array<i32>} : memref<16x32xf32, #tpu.memory_space<vmem>>, vector<2x32xf32>,
    %129 = vector.extract_strided_slice %9 {offsets = [8, 0], sizes = [2, 128], strides = [1, 1]} : vector<16x128xf32> to vector<2x128xf32>
    %cst_34 = arith.constant dense<0.000000e+00> : vector<2x128xf32>
    %130 = tpu.matmul %127, %10, %cst_34 {dimension_numbers = #tpu.dot_dimension_numbers<[1], [0], [0], [1], [0, 0, 1, 1], [], []>} : vector<2x32xf32>, vector<32x128xf32>, vector<2x128xf32> -> vector<2x128xf32>
    %131 = arith.addf %129, %130 : vector<2x128xf32>
    %132 = vector.extract_strided_slice %131 {offsets = [0, 0], sizes = [2, 32], strides = [1, 1]} : vector<2x128xf32> to vector<2x32xf32>
    %133 = arith.negf %132 : vector<2x32xf32>
    %134 = math.exp %133 : vector<2x32xf32>
    %cst_35 = arith.constant 1.000000e+00 : f32
    %135 = vector.broadcast %cst_35 : f32 to vector<2x32xf32>
    %136 = arith.addf %135, %134 : vector<2x32xf32>
    %137 = arith.divf %135, %136 : vector<2x32xf32>
    %138 = vector.extract_strided_slice %131 {offsets = [0, 32], sizes = [2, 32], strides = [1, 1]} : vector<2x128xf32> to vector<2x32xf32>
    %139 = arith.negf %138 : vector<2x32xf32>
    %140 = math.exp %139 : vector<2x32xf32>
    %cst_36 = arith.constant 1.000000e+00 : f32
    %141 = vector.broadcast %cst_36 : f32 to vector<2x32xf32>
    %142 = arith.addf %141, %140 : vector<2x32xf32>
    %143 = arith.divf %141, %142 : vector<2x32xf32>
    %144 = vector.extract_strided_slice %131 {offsets = [0, 64], sizes = [2, 32], strides = [1, 1]} : vector<2x128xf32> to vector<2x32xf32>
    %145 = math.tanh %144 : vector<2x32xf32>
    %146 = vector.extract_strided_slice %131 {offsets = [0, 96], sizes = [2, 32], strides = [1, 1]} : vector<2x128xf32> to vector<2x32xf32>
    %147 = arith.negf %146 : vector<2x32xf32>
    %148 = math.exp %147 : vector<2x32xf32>
    %cst_37 = arith.constant 1.000000e+00 : f32
    %149 = vector.broadcast %cst_37 : f32 to vector<2x32xf32>
    %150 = arith.addf %149, %148 : vector<2x32xf32>
    %151 = arith.divf %149, %150 : vector<2x32xf32>
    %152 = arith.mulf %143, %125 : vector<2x32xf32>
    %153 = arith.mulf %137, %145 : vector<2x32xf32>
    %154 = arith.addf %152, %153 : vector<2x32xf32>
    %155 = math.tanh %154 : vector<2x32xf32>
    %156 = arith.mulf %151, %155 : vector<2x32xf32>
    %c8 = arith.constant 8 : index
    %c0_38 = arith.constant 0 : index
    %157 = vector.load %arg12[%c8, %c0_38] : memref<16x32xf32, #tpu.memory_space<vmem>>, vector<2x32xf32>
    tpu.vector_store %arg12[%c8, %c0_38], %156 {strides = array<i32>} : memref<16x32xf32, #tpu.memory_space<vmem>>, vector<2x32xf32>,
    %158 = vector.extract_strided_slice %9 {offsets = [10, 0], sizes = [2, 128], strides = [1, 1]} : vector<16x128xf32> to vector<2x128xf32>
    %cst_39 = arith.constant dense<0.000000e+00> : vector<2x128xf32>
    %159 = tpu.matmul %156, %10, %cst_39 {dimension_numbers = #tpu.dot_dimension_numbers<[1], [0], [0], [1], [0, 0, 1, 1], [], []>} : vector<2x32xf32>, vector<32x128xf32>, vector<2x128xf32> -> vector<2x128xf32>
    %160 = arith.addf %158, %159 : vector<2x128xf32>
    %161 = vector.extract_strided_slice %160 {offsets = [0, 0], sizes = [2, 32], strides = [1, 1]} : vector<2x128xf32> to vector<2x32xf32>
    %162 = arith.negf %161 : vector<2x32xf32>
    %163 = math.exp %162 : vector<2x32xf32>
    %cst_40 = arith.constant 1.000000e+00 : f32
    %164 = vector.broadcast %cst_40 : f32 to vector<2x32xf32>
    %165 = arith.addf %164, %163 : vector<2x32xf32>
    %166 = arith.divf %164, %165 : vector<2x32xf32>
    %167 = vector.extract_strided_slice %160 {offsets = [0, 32], sizes = [2, 32], strides = [1, 1]} : vector<2x128xf32> to vector<2x32xf32>
    %168 = arith.negf %167 : vector<2x32xf32>
    %169 = math.exp %168 : vector<2x32xf32>
    %cst_41 = arith.constant 1.000000e+00 : f32
    %170 = vector.broadcast %cst_41 : f32 to vector<2x32xf32>
    %171 = arith.addf %170, %169 : vector<2x32xf32>
    %172 = arith.divf %170, %171 : vector<2x32xf32>
    %173 = vector.extract_strided_slice %160 {offsets = [0, 64], sizes = [2, 32], strides = [1, 1]} : vector<2x128xf32> to vector<2x32xf32>
    %174 = math.tanh %173 : vector<2x32xf32>
    %175 = vector.extract_strided_slice %160 {offsets = [0, 96], sizes = [2, 32], strides = [1, 1]} : vector<2x128xf32> to vector<2x32xf32>
    %176 = arith.negf %175 : vector<2x32xf32>
    %177 = math.exp %176 : vector<2x32xf32>
    %cst_42 = arith.constant 1.000000e+00 : f32
    %178 = vector.broadcast %cst_42 : f32 to vector<2x32xf32>
    %179 = arith.addf %178, %177 : vector<2x32xf32>
    %180 = arith.divf %178, %179 : vector<2x32xf32>
    %181 = arith.mulf %172, %154 : vector<2x32xf32>
    %182 = arith.mulf %166, %174 : vector<2x32xf32>
    %183 = arith.addf %181, %182 : vector<2x32xf32>
    %184 = math.tanh %183 : vector<2x32xf32>
    %185 = arith.mulf %180, %184 : vector<2x32xf32>
    %c10 = arith.constant 10 : index
    %c0_43 = arith.constant 0 : index
    %186 = vector.load %arg12[%c10, %c0_43] : memref<16x32xf32, #tpu.memory_space<vmem>>, vector<2x32xf32>
    tpu.vector_store %arg12[%c10, %c0_43], %185 {strides = array<i32>} : memref<16x32xf32, #tpu.memory_space<vmem>>, vector<2x32xf32>,
    %187 = vector.extract_strided_slice %9 {offsets = [12, 0], sizes = [2, 128], strides = [1, 1]} : vector<16x128xf32> to vector<2x128xf32>
    %cst_44 = arith.constant dense<0.000000e+00> : vector<2x128xf32>
    %188 = tpu.matmul %185, %10, %cst_44 {dimension_numbers = #tpu.dot_dimension_numbers<[1], [0], [0], [1], [0, 0, 1, 1], [], []>} : vector<2x32xf32>, vector<32x128xf32>, vector<2x128xf32> -> vector<2x128xf32>
    %189 = arith.addf %187, %188 : vector<2x128xf32>
    %190 = vector.extract_strided_slice %189 {offsets = [0, 0], sizes = [2, 32], strides = [1, 1]} : vector<2x128xf32> to vector<2x32xf32>
    %191 = arith.negf %190 : vector<2x32xf32>
    %192 = math.exp %191 : vector<2x32xf32>
    %cst_45 = arith.constant 1.000000e+00 : f32
    %193 = vector.broadcast %cst_45 : f32 to vector<2x32xf32>
    %194 = arith.addf %193, %192 : vector<2x32xf32>
    %195 = arith.divf %193, %194 : vector<2x32xf32>
    %196 = vector.extract_strided_slice %189 {offsets = [0, 32], sizes = [2, 32], strides = [1, 1]} : vector<2x128xf32> to vector<2x32xf32>
    %197 = arith.negf %196 : vector<2x32xf32>
    %198 = math.exp %197 : vector<2x32xf32>
    %cst_46 = arith.constant 1.000000e+00 : f32
    %199 = vector.broadcast %cst_46 : f32 to vector<2x32xf32>
    %200 = arith.addf %199, %198 : vector<2x32xf32>
    %201 = arith.divf %199, %200 : vector<2x32xf32>
    %202 = vector.extract_strided_slice %189 {offsets = [0, 64], sizes = [2, 32], strides = [1, 1]} : vector<2x128xf32> to vector<2x32xf32>
    %203 = math.tanh %202 : vector<2x32xf32>
    %204 = vector.extract_strided_slice %189 {offsets = [0, 96], sizes = [2, 32], strides = [1, 1]} : vector<2x128xf32> to vector<2x32xf32>
    %205 = arith.negf %204 : vector<2x32xf32>
    %206 = math.exp %205 : vector<2x32xf32>
    %cst_47 = arith.constant 1.000000e+00 : f32
    %207 = vector.broadcast %cst_47 : f32 to vector<2x32xf32>
    %208 = arith.addf %207, %206 : vector<2x32xf32>
    %209 = arith.divf %207, %208 : vector<2x32xf32>
    %210 = arith.mulf %201, %183 : vector<2x32xf32>
    %211 = arith.mulf %195, %203 : vector<2x32xf32>
    %212 = arith.addf %210, %211 : vector<2x32xf32>
    %213 = math.tanh %212 : vector<2x32xf32>
    %214 = arith.mulf %209, %213 : vector<2x32xf32>
    %c12 = arith.constant 12 : index
    %c0_48 = arith.constant 0 : index
    %215 = vector.load %arg12[%c12, %c0_48] : memref<16x32xf32, #tpu.memory_space<vmem>>, vector<2x32xf32>
    tpu.vector_store %arg12[%c12, %c0_48], %214 {strides = array<i32>} : memref<16x32xf32, #tpu.memory_space<vmem>>, vector<2x32xf32>,
    %216 = vector.extract_strided_slice %9 {offsets = [14, 0], sizes = [2, 128], strides = [1, 1]} : vector<16x128xf32> to vector<2x128xf32>
    %cst_49 = arith.constant dense<0.000000e+00> : vector<2x128xf32>
    %217 = tpu.matmul %214, %10, %cst_49 {dimension_numbers = #tpu.dot_dimension_numbers<[1], [0], [0], [1], [0, 0, 1, 1], [], []>} : vector<2x32xf32>, vector<32x128xf32>, vector<2x128xf32> -> vector<2x128xf32>
    %218 = arith.addf %216, %217 : vector<2x128xf32>
    %219 = vector.extract_strided_slice %218 {offsets = [0, 0], sizes = [2, 32], strides = [1, 1]} : vector<2x128xf32> to vector<2x32xf32>
    %220 = arith.negf %219 : vector<2x32xf32>
    %221 = math.exp %220 : vector<2x32xf32>
    %cst_50 = arith.constant 1.000000e+00 : f32
    %222 = vector.broadcast %cst_50 : f32 to vector<2x32xf32>
    %223 = arith.addf %222, %221 : vector<2x32xf32>
    %224 = arith.divf %222, %223 : vector<2x32xf32>
    %225 = vector.extract_strided_slice %218 {offsets = [0, 32], sizes = [2, 32], strides = [1, 1]} : vector<2x128xf32> to vector<2x32xf32>
    %226 = arith.negf %225 : vector<2x32xf32>
    %227 = math.exp %226 : vector<2x32xf32>
    %cst_51 = arith.constant 1.000000e+00 : f32
    %228 = vector.broadcast %cst_51 : f32 to vector<2x32xf32>
    %229 = arith.addf %228, %227 : vector<2x32xf32>
    %230 = arith.divf %228, %229 : vector<2x32xf32>
    %231 = vector.extract_strided_slice %218 {offsets = [0, 64], sizes = [2, 32], strides = [1, 1]} : vector<2x128xf32> to vector<2x32xf32>
    %232 = math.tanh %231 : vector<2x32xf32>
    %233 = vector.extract_strided_slice %218 {offsets = [0, 96], sizes = [2, 32], strides = [1, 1]} : vector<2x128xf32> to vector<2x32xf32>
    %234 = arith.negf %233 : vector<2x32xf32>
    %235 = math.exp %234 : vector<2x32xf32>
    %cst_52 = arith.constant 1.000000e+00 : f32
    %236 = vector.broadcast %cst_52 : f32 to vector<2x32xf32>
    %237 = arith.addf %236, %235 : vector<2x32xf32>
    %238 = arith.divf %236, %237 : vector<2x32xf32>
    %239 = arith.mulf %230, %212 : vector<2x32xf32>
    %240 = arith.mulf %224, %232 : vector<2x32xf32>
    %241 = arith.addf %239, %240 : vector<2x32xf32>
    %242 = math.tanh %241 : vector<2x32xf32>
    %243 = arith.mulf %238, %242 : vector<2x32xf32>
    %c14 = arith.constant 14 : index
    %c0_53 = arith.constant 0 : index
    %244 = vector.load %arg12[%c14, %c0_53] : memref<16x32xf32, #tpu.memory_space<vmem>>, vector<2x32xf32>
    tpu.vector_store %arg12[%c14, %c0_53], %243 {strides = array<i32>} : memref<16x32xf32, #tpu.memory_space<vmem>>, vector<2x32xf32>,
    %c0_54 = arith.constant 0 : index
    %c0_55 = arith.constant 0 : index
    %245 = vector.load %arg12[%c0_54, %c0_55] : memref<16x32xf32, #tpu.memory_space<vmem>>, vector<16x32xf32>
    %c0_56 = arith.constant 0 : index
    %c0_57 = arith.constant 0 : index
    %246 = vector.load %arg4[%c0_56, %c0_57] : memref<16x32xf32, #tpu.memory_space<vmem>>, vector<16x32xf32>
    %247 = arith.mulf %245, %246 : vector<16x32xf32>
    %c0_58 = arith.constant 0 : index
    %c0_59 = arith.constant 0 : index
    %248 = vector.load %arg9[%c0_58, %c0_59] : memref<32x128xf32, #tpu.memory_space<vmem>>, vector<32x128xf32>
    %cst_60 = arith.constant dense<0.000000e+00> : vector<16x128xf32>
    %249 = tpu.matmul %247, %248, %cst_60 {dimension_numbers = #tpu.dot_dimension_numbers<[1], [0], [0], [1], [0, 0, 1, 1], [], []>} : vector<16x32xf32>, vector<32x128xf32>, vector<16x128xf32> -> vector<16x128xf32>
    %c0_61 = arith.constant 0 : index
    %c0_62 = arith.constant 0 : index
    %250 = vector.load %arg5[%c0_61, %c0_62] : memref<16x128xf32, #tpu.memory_space<vmem>>, vector<16x128xf32>
    %251 = arith.addf %249, %250 : vector<16x128xf32>
    %c0_63 = arith.constant 0 : index
    %c0_64 = arith.constant 0 : index
    %252 = vector.load %arg10[%c0_63, %c0_64] : memref<1x128xf32, #tpu.memory_space<vmem>>, vector<1x128xf32>
    %253 = vector.broadcast %252 : vector<1x128xf32> to vector<16x128xf32>
    %254 = arith.addf %251, %253 : vector<16x128xf32>
    %255 = arith.negf %254 : vector<16x128xf32>
    %256 = math.exp %255 : vector<16x128xf32>
    %cst_65 = arith.constant 1.000000e+00 : f32
    %257 = vector.broadcast %cst_65 : f32 to vector<16x128xf32>
    %258 = arith.addf %257, %256 : vector<16x128xf32>
    %259 = arith.divf %257, %258 : vector<16x128xf32>
    %c0_66 = arith.constant 0 : index
    %c0_67 = arith.constant 0 : index
    %260 = vector.load %arg11[%c0_66, %c0_67] : memref<16x128xf32, #tpu.memory_space<vmem>>, vector<16x128xf32>
    tpu.vector_store %arg11[%c0_66, %c0_67], %259 {strides = array<i32>} : memref<16x128xf32, #tpu.memory_space<vmem>>, vector<16x128xf32>,
    return
  }
  func.func @transform_0(%arg0: i32) -> (i32, i32) {
    %c0_i32 = arith.constant 0 : i32
    %c0_i32_0 = arith.constant 0 : i32
    %c0_i32_1 = arith.constant 0 : i32
    return %c0_i32, %c0_i32_0 : i32, i32
  }
  func.func @transform_1(%arg0: i32) -> (i32, i32) {
    %c0_i32 = arith.constant 0 : i32
    %c0_i32_0 = arith.constant 0 : i32
    %c0_i32_1 = arith.constant 0 : i32
    return %c0_i32, %c0_i32_0 : i32, i32
  }
  func.func @transform_2(%arg0: i32) -> (i32, i32) {
    %c0_i32 = arith.constant 0 : i32
    %c0_i32_0 = arith.constant 0 : i32
    %c0_i32_1 = arith.constant 0 : i32
    return %c0_i32, %c0_i32_0 : i32, i32
  }
  func.func @transform_3(%arg0: i32) -> (i32, i32) {
    %c0_i32 = arith.constant 0 : i32
    %c0_i32_0 = arith.constant 0 : i32
    %c0_i32_1 = arith.constant 0 : i32
    return %c0_i32, %c0_i32_0 : i32, i32
  }
  func.func @transform_4(%arg0: i32) -> (i32, i32) {
    %c0_i32 = arith.constant 0 : i32
    %c0_i32_0 = arith.constant 0 : i32
    %c0_i32_1 = arith.constant 0 : i32
    return %c0_i32, %c0_i32_0 : i32, i32
  }
  func.func @transform_5(%arg0: i32) -> (i32, i32) {
    %c0_i32 = arith.constant 0 : i32
    %c0_i32_0 = arith.constant 0 : i32
    %c0_i32_1 = arith.constant 0 : i32
    return %c0_i32, %c0_i32_0 : i32, i32
  }
  func.func @transform_6(%arg0: i32) -> (i32, i32) {
    %c0_i32 = arith.constant 0 : i32
    %c0_i32_0 = arith.constant 0 : i32
    %c0_i32_1 = arith.constant 0 : i32
    return %c0_i32, %c0_i32_0 : i32, i32
  }
  func.func @transform_7(%arg0: i32) -> (i32, i32) {
    %c0_i32 = arith.constant 0 : i32
    %c0_i32_0 = arith.constant 0 : i32
    %c0_i32_1 = arith.constant 0 : i32
    return %c0_i32, %c0_i32_0 : i32, i32
  }
  func.func @transform_8(%arg0: i32) -> (i32, i32) {
    %c0_i32 = arith.constant 0 : i32
    %c0_i32_0 = arith.constant 0 : i32
    %c0_i32_1 = arith.constant 0 : i32
    return %c0_i32, %c0_i32_0 : i32, i32
  }
  func.func @transform_9(%arg0: i32) -> (i32, i32) {
    %c0_i32 = arith.constant 0 : i32
    %c0_i32_0 = arith.constant 0 : i32
    %c0_i32_1 = arith.constant 0 : i32
    return %c0_i32, %c0_i32_0 : i32, i32
  }
  func.func @transform_10(%arg0: i32) -> (i32, i32) {
    %c0_i32 = arith.constant 0 : i32
    %c0_i32_0 = arith.constant 0 : i32
    %c0_i32_1 = arith.constant 0 : i32
    return %c0_i32, %c0_i32_0 : i32, i32
  }
}

</mosaic_0001>

<llo_original>
// kernel: dkt_forget_forward.1
$region0: #{dkt_forget_forward.1}
  #allocation0 [shape = 'u32[]', space=smem, size = 0x4, offset = 0x4, fixed_abs, tag = 'smem constant byte address 0x4 - core index']
  #allocation1 [shape = 'u32[144,128]{1,0:T(1,128)}', space=vmem, size = 0x12000, scoped, tag = 'internal scratch']
  #allocation2 [shape = 'f32[16,32]{1,0:T(8,128)}', space=vmem, size = 0x2000, scoped, tag = 'scratch operand']
  %s0 = inlined_call_operand.vmem [shape: f32[16,32], index: 0, kind: input, shape index: {}]
  %s1 = inlined_call_operand.vmem [shape: f32[16,32], index: 1, kind: input, shape index: {}]
  %s2 = inlined_call_operand.vmem [shape: f32[16,128], index: 2, kind: input, shape index: {}]
  %s3 = inlined_call_operand.vmem [shape: f32[16,32], index: 3, kind: input, shape index: {}]
  %s4 = inlined_call_operand.vmem [shape: f32[16,128], index: 4, kind: input, shape index: {}]
  %s5 = inlined_call_operand.vmem [shape: f32[32,128], index: 5, kind: input, shape index: {}]
  %s6 = inlined_call_operand.vmem [shape: f32[32,128], index: 6, kind: input, shape index: {}]
  %s7 = inlined_call_operand.vmem [shape: f32[1,128], index: 7, kind: input, shape index: {}]
  %s8 = inlined_call_operand.vmem [shape: f32[32,128], index: 8, kind: input, shape index: {}]
  %s9 = inlined_call_operand.vmem [shape: f32[1,128], index: 9, kind: input, shape index: {}]
  %s10 = inlined_call_operand.hbm [shape: f32[16,128], index: 10, kind: output, shape index: {}]
  %s11 = sld [smem:[#allocation0]]
  $region50: #{dkt_forget_forward.1} parent=0
    _
  %s13 = ssub.s32 1, %s11
  %s14 = scalar_select 0, %s13, %s11
  $region1: #{dkt_forget_forward.1} parent=0
    #allocation3 [shape = 'u8[8192]{0}', space=vmem, size = 0x2000, scoped, tag = 'output window, operand 0, single buffered']
    #allocation4 [shape = 's32[1]{0}', space=sflag, size = 0x4, scoped, tag = 'scoped memory for dkt_forget_forward.1']
    %15 = vsyncpa [#allocation4], 0
    // Predicated region
    $region2: #{dkt_forget_forward.1} parent=1 // pred_check
      _
    $region3: #{dkt_forget_forward.1} parent=1 // pred_check_branch
      %17 = sbr.rel (0) target = $region5
    $region4: #{dkt_forget_forward.1} parent=1 // pred_region
      _
    $region5: #{dkt_forget_forward.1} parent=1 // pred_fallthru
      _
    // Predicated region
    $region6: #{dkt_forget_forward.1} parent=1 // pred_check
      _
    $region7: #{dkt_forget_forward.1} parent=1 // pred_check_branch
      %19 = sbr.rel (0) target = $region9
    $region8: #{dkt_forget_forward.1} parent=1 // pred_region
      _
    $region9: #{dkt_forget_forward.1} parent=1 // pred_fallthru
      _
    // Predicated region
    $region10: #{dkt_forget_forward.1} parent=1 // pred_check
      _
    $region11: #{dkt_forget_forward.1} parent=1 // pred_check_branch
      %21 = sbr.rel (0) target = $region13
    $region12: #{dkt_forget_forward.1} parent=1 // pred_region
      _
    $region13: #{dkt_forget_forward.1} parent=1 // pred_fallthru
      _
    // Predicated region
    $region14: #{dkt_forget_forward.1} parent=1 // pred_check
      _
    $region15: #{dkt_forget_forward.1} parent=1 // pred_check_branch
      %23 = sbr.rel (0) target = $region17
    $region16: #{dkt_forget_forward.1} parent=1 // pred_region
      _
    $region17: #{dkt_forget_forward.1} parent=1 // pred_fallthru
      _
    // Predicated region
    $region18: #{dkt_forget_forward.1} parent=1 // pred_check
      _
    $region19: #{dkt_forget_forward.1} parent=1 // pred_check_branch
      %25 = sbr.rel (0) target = $region21
    $region20: #{dkt_forget_forward.1} parent=1 // pred_region
      _
    $region21: #{dkt_forget_forward.1} parent=1 // pred_fallthru
      _
    // Predicated region
    $region22: #{dkt_forget_forward.1} parent=1 // pred_check
      _
    $region23: #{dkt_forget_forward.1} parent=1 // pred_check_branch
      %27 = sbr.rel (0) target = $region25
    $region24: #{dkt_forget_forward.1} parent=1 // pred_region
      _
    $region25: #{dkt_forget_forward.1} parent=1 // pred_fallthru
      _
    // Predicated region
    $region26: #{dkt_forget_forward.1} parent=1 // pred_check
      _
    $region27: #{dkt_forget_forward.1} parent=1 // pred_check_branch
      %29 = sbr.rel (0) target = $region29
    $region28: #{dkt_forget_forward.1} parent=1 // pred_region
      _
    $region29: #{dkt_forget_forward.1} parent=1 // pred_fallthru
      _
    // Predicated region
    $region30: #{dkt_forget_forward.1} parent=1 // pred_check
      _
    $region31: #{dkt_forget_forward.1} parent=1 // pred_check_branch
      %31 = sbr.rel (0) target = $region33
    $region32: #{dkt_forget_forward.1} parent=1 // pred_region
      _
    $region33: #{dkt_forget_forward.1} parent=1 // pred_fallthru
      _
    // Predicated region
    $region34: #{dkt_forget_forward.1} parent=1 // pred_check
      _
    $region35: #{dkt_forget_forward.1} parent=1 // pred_check_branch
      %33 = sbr.rel (0) target = $region37
    $region36: #{dkt_forget_forward.1} parent=1 // pred_region
      _
    $region37: #{dkt_forget_forward.1} parent=1 // pred_fallthru
      _
    // Predicated region
    $region38: #{dkt_forget_forward.1} parent=1 // pred_check
      _
    $region39: #{dkt_forget_forward.1} parent=1 // pred_check_branch
      %35 = sbr.rel (0) target = $region41
    $region40: #{dkt_forget_forward.1} parent=1 // pred_region
      _
    $region41: #{dkt_forget_forward.1} parent=1 // pred_fallthru
      _
    %v36 = vld [vmem:[%s0] sm:$0xff]
    %v37 = vld [vmem:[%s0 + $0x8] sm:$0xff]
    %v38 = vld [vmem:[%s1] sm:$0xff]
    %v39 = vld [vmem:[%s1 + $0x8] sm:$0xff]
    %v40 = vmul.f32 %v36, %v38
    %v41 = vmul.f32 %v37, %v39
    %v42 = vld [vmem:[%s5] sm:$0xff]
    %v43 = vld [vmem:[%s5 + $0x8] sm:$0xff]
    %v44 = vld [vmem:[%s5 + $0x10] sm:$0xff]
    %v45 = vld [vmem:[%s5 + $0x18] sm:$0xff]
    %v46 = vld [vmem:[%s2] sm:$0xff]
    %v47 = vld [vmem:[%s2 + $0x8] sm:$0xff]
    %vm48 = vcmask 261120
    %v50 = vsel %vm48, %v40, 0
    %v53 = vsel %vm48, %v41, 0
    %55 = vmatprep.subr.mxu0 0.0
    %56 = vmatpush1.msra.mxu0 %v42
    %57 = vmatprep.subr.mxu0 0.0
    %58 = vmatpush1.msra.mxu0 %v43
    %59 = vmatprep.subr.mxu0 0.0
    %60 = vmatpush1.msra.mxu0 %v44
    %61 = vmatprep.subr.mxu0 0.0
    %62 = vmatpush1.msra.mxu0 %v45
    %63 = vmatprep.subr.mxu0 0.0
    %64 = vmatpush1.msra.mxu0 0.0
    %65 = vmatprep.subr.mxu0 0.0
    %66 = vmatpush1.msra.mxu0 0.0
    %67 = vmatprep.subr.mxu0 0.0
    %68 = vmatpush1.msra.mxu0 0.0
    %69 = vmatprep.subr.mxu0 0.0
    %70 = vmatpush1.msra.mxu0 0.0
    %71 = vmatprep.subr.mxu0 0.0
    %72 = vmatpush1.msra.mxu0 0.0
    %73 = vmatprep.subr.mxu0 0.0
    %74 = vmatpush1.msra.mxu0 0.0
    %75 = vmatprep.subr.mxu0 0.0
    %76 = vmatpush1.msra.mxu0 0.0
    %77 = vmatprep.subr.mxu0 0.0
    %78 = vmatpush1.msra.mxu0 0.0
    %79 = vmatprep.subr.mxu0 0.0
    %80 = vmatpush1.msra.mxu0 0.0
    %81 = vmatprep.subr.mxu0 0.0
    %82 = vmatpush1.msra.mxu0 0.0
    %83 = vmatprep.subr.mxu0 0.0
    %84 = vmatpush1.msra.mxu0 0.0
    %85 = vmatprep.subr.mxu0 0.0
    %86 = vmatpush1.msra.mxu0 0.0
    %87 = vmatprep.subr.mxu0 0.0
    %88 = vmatpush1.msra.mxu0 0.0
    %89 = vmatprep.subr.mxu0 0.0
    %90 = vmatpush1.msra.mxu0 0.0
    %91 = vmatprep.subr.mxu0 0.0
    %92 = vmatpush1.msra.mxu0 0.0
    %93 = vmatprep.subr.mxu0 0.0
    %94 = vmatpush1.msra.mxu0 0.0
    %95 = vmatprep.subr.mxu0 0.0
    %96 = vmatpush1.msra.mxu0 0.0
    %97 = vmatprep.subr.mxu0 0.0
    %98 = vmatpush1.msra.mxu0 0.0
    %99 = vmatprep.subr.mxu0 0.0
    %100 = vmatpush1.msra.mxu0 0.0
    %101 = vmatprep.subr.mxu0 0.0
    %102 = vmatpush1.msra.mxu0 0.0
    %103 = vmatprep.subr.mxu0 0.0
    %104 = vmatpush1.msra.mxu0 0.0
    %105 = vmatprep.subr.mxu0 0.0
    %106 = vmatpush1.msra.mxu0 0.0
    %107 = vmatprep.subr.mxu0 0.0
    %108 = vmatpush1.msra.mxu0 0.0
    %109 = vmatprep.subr.mxu0 0.0
    %110 = vmatpush1.msra.mxu0 0.0
    %111 = vmatprep.subr.mxu0 0.0
    %112 = vmatpush1.msra.mxu0 0.0
    %113 = vmatprep.subr.mxu0 0.0
    %114 = vmatpush1.msra.mxu0 0.0
    %115 = vmatprep.subr.mxu0 0.0
    %116 = vmatpush1.msra.mxu0 0.0
    %117 = vmatprep.subr.mxu0 0.0
    %118 = vmatpush1.msra.mxu0 0.0
    %119 = vmatprep.mubr.f32.mxu0 0.0
    %120 = vmatmul.mubr.f32.gmra.mrb[0].mxu0 %v50
    %v121 = vpop.f32.mrb[0].mxu0
    %v122 = vadd.f32 %v46, %v121
    %v123 = vpop.f32.mrb[0].mxu0
    %124 = vmatprep.mubr.f32.mxu0 0.0
    %125 = vmatmul.mubr.f32.gmra.mrb[0].mxu0 %v53
    %v126 = vpop.f32.mrb[0].mxu0
    %v127 = vadd.f32 %v47, %v126
    %v128 = vpop.f32.mrb[0].mxu0
    %129 = vdwg.mxu0
    %v130 = vld [vmem:[%s7] sm:$0x1]
    %v132 = vlaneseq
    %v133 = vshrl.u32 %v132, 7
    %v134 = vsub.s32 0, %v133
    %v135 = vrot.slane %v130, %v134
    %v137 = vadd.f32 %v122, %v135
    %v138 = vadd.f32 %v127, %v135
    %v139 = vld [vmem:[%s6] sm:$0xff]
    %v140 = vld [vmem:[%s6 + $0x8] sm:$0xff]
    %v141 = vld [vmem:[%s6 + $0x10] sm:$0xff]
    %v142 = vld [vmem:[%s6 + $0x18] sm:$0xff]
    %v144 = vsel %vm48, 0.0, 0
    %146 = vmatprep.subr.mxu0 0.0
    %147 = vmatpush1.msra.mxu0 %v139
    %148 = vmatprep.subr.mxu0 0.0
    %149 = vmatpush1.msra.mxu0 %v140
    %150 = vmatprep.subr.mxu0 0.0
    %151 = vmatpush1.msra.mxu0 %v141
    %152 = vmatprep.subr.mxu0 0.0
    %153 = vmatpush1.msra.mxu0 %v142
    %154 = vmatprep.subr.mxu0 0.0
    %155 = vmatpush1.msra.mxu0 0.0
    %156 = vmatprep.subr.mxu0 0.0
    %157 = vmatpush1.msra.mxu0 0.0
    %158 = vmatprep.subr.mxu0 0.0
    %159 = vmatpush1.msra.mxu0 0.0
    %160 = vmatprep.subr.mxu0 0.0
    %161 = vmatpush1.msra.mxu0 0.0
    %162 = vmatprep.subr.mxu0 0.0
    %163 = vmatpush1.msra.mxu0 0.0
    %164 = vmatprep.subr.mxu0 0.0
    %165 = vmatpush1.msra.mxu0 0.0
    %166 = vmatprep.subr.mxu0 0.0
    %167 = vmatpush1.msra.mxu0 0.0
    %168 = vmatprep.subr.mxu0 0.0
    %169 = vmatpush1.msra.mxu0 0.0
    %170 = vmatprep.subr.mxu0 0.0
    %171 = vmatpush1.msra.mxu0 0.0
    %172 = vmatprep.subr.mxu0 0.0
    %173 = vmatpush1.msra.mxu0 0.0
    %174 = vmatprep.subr.mxu0 0.0
    %175 = vmatpush1.msra.mxu0 0.0
    %176 = vmatprep.subr.mxu0 0.0
    %177 = vmatpush1.msra.mxu0 0.0
    %178 = vmatprep.subr.mxu0 0.0
    %179 = vmatpush1.msra.mxu0 0.0
    %180 = vmatprep.subr.mxu0 0.0
    %181 = vmatpush1.msra.mxu0 0.0
    %182 = vmatprep.subr.mxu0 0.0
    %183 = vmatpush1.msra.mxu0 0.0
    %184 = vmatprep.subr.mxu0 0.0
    %185 = vmatpush1.msra.mxu0 0.0
    %186 = vmatprep.subr.mxu0 0.0
    %187 = vmatpush1.msra.mxu0 0.0
    %188 = vmatprep.subr.mxu0 0.0
    %189 = vmatpush1.msra.mxu0 0.0
    %190 = vmatprep.subr.mxu0 0.0
    %191 = vmatpush1.msra.mxu0 0.0
    %192 = vmatprep.subr.mxu0 0.0
    %193 = vmatpush1.msra.mxu0 0.0
    %194 = vmatprep.subr.mxu0 0.0
    %195 = vmatpush1.msra.mxu0 0.0
    %196 = vmatprep.subr.mxu0 0.0
    %197 = vmatpush1.msra.mxu0 0.0
    %198 = vmatprep.subr.mxu0 0.0
    %199 = vmatpush1.msra.mxu0 0.0
    %200 = vmatprep.subr.mxu0 0.0
    %201 = vmatpush1.msra.mxu0 0.0
    %202 = vmatprep.subr.mxu0 0.0
    %203 = vmatpush1.msra.mxu0 0.0
    %204 = vmatprep.subr.mxu0 0.0
    %205 = vmatpush1.msra.mxu0 0.0
    %206 = vmatprep.subr.mxu0 0.0
    %207 = vmatpush1.msra.mxu0 0.0
    %208 = vmatprep.subr.mxu0 0.0
    %209 = vmatpush1.msra.mxu0 0.0
    %210 = vmatprep.mubr.f32.mxu0 0.0
    %211 = vmatmul.mubr.f32.gmra.mrb[0].mxu0 %v144
    %v212 = vpop.f32.mrb[0].mxu0
    %v213 = vadd.f32 0.0, %v212
    %v214 = vpop.f32.mrb[0].mxu0
    %215 = vdwg.mxu0
    %v216 = vadd.f32 %v137, %v213
    %v217 = vxor.u32 %v216, 2147483648
    %v218 = vmul.f32 %v217, 1.442695
    %v219 = vpow.pop %v218
    %v220 = vadd.f32 %v219, 1.0
    %v221 = vrcp.pop %v220
    %v222 = vmul.f32 1.0, %v221
    %v223 = vtanh.pop %v216
    %v224 = vmul.f32 %v222, 0.0
    %226 = vrot.lane.b32.xlu0 %v223, 64
    %v227 = vpop.permute.xlu0 %226
    %v229 = vmul.f32 %v222, %v227
    %231 = vrot.lane.b32.xlu0 %v229, 32
    %v232 = vpop.permute.xlu0 %231
    %v234 = vadd.f32 %v224, %v232
    %v235 = vtanh.pop %v234
    %237 = vrot.lane.b32.xlu0 %v235, 64
    %v238 = vpop.permute.xlu0 %237
    %v240 = vmul.f32 %v222, %v238
    %242 = vrot.lane.b32.xlu0 %v240, 32
    %v243 = vpop.permute.xlu0 %242
    %vm245 = vcmask 254976
    %246 = vst.msk [vmem:[#allocation2] sm:$0x3] %vm245, %v243
    %v247 = vsel %vm48, %v243, 0
    %249 = vmatprep.subr.mxu0 0.0
    %250 = vmatpush1.msra.mxu0 %v139
    %251 = vmatprep.subr.mxu0 0.0
    %252 = vmatpush1.msra.mxu0 %v140
    %253 = vmatprep.subr.mxu0 0.0
    %254 = vmatpush1.msra.mxu0 %v141
    %255 = vmatprep.subr.mxu0 0.0
    %256 = vmatpush1.msra.mxu0 %v142
    %257 = vmatprep.subr.mxu0 0.0
    %258 = vmatpush1.msra.mxu0 0.0
    %259 = vmatprep.subr.mxu0 0.0
    %260 = vmatpush1.msra.mxu0 0.0
    %261 = vmatprep.subr.mxu0 0.0
    %262 = vmatpush1.msra.mxu0 0.0
    %263 = vmatprep.subr.mxu0 0.0
    %264 = vmatpush1.msra.mxu0 0.0
    %265 = vmatprep.subr.mxu0 0.0
    %266 = vmatpush1.msra.mxu0 0.0
    %267 = vmatprep.subr.mxu0 0.0
    %268 = vmatpush1.msra.mxu0 0.0
    %269 = vmatprep.subr.mxu0 0.0
    %270 = vmatpush1.msra.mxu0 0.0
    %271 = vmatprep.subr.mxu0 0.0
    %272 = vmatpush1.msra.mxu0 0.0
    %273 = vmatprep.subr.mxu0 0.0
    %274 = vmatpush1.msra.mxu0 0.0
    %275 = vmatprep.subr.mxu0 0.0
    %276 = vmatpush1.msra.mxu0 0.0
    %277 = vmatprep.subr.mxu0 0.0
    %278 = vmatpush1.msra.mxu0 0.0
    %279 = vmatprep.subr.mxu0 0.0
    %280 = vmatpush1.msra.mxu0 0.0
    %281 = vmatprep.subr.mxu0 0.0
    %282 = vmatpush1.msra.mxu0 0.0
    %283 = vmatprep.subr.mxu0 0.0
    %284 = vmatpush1.msra.mxu0 0.0
    %285 = vmatprep.subr.mxu0 0.0
    %286 = vmatpush1.msra.mxu0 0.0
    %287 = vmatprep.subr.mxu0 0.0
    %288 = vmatpush1.msra.mxu0 0.0
    %289 = vmatprep.subr.mxu0 0.0
    %290 = vmatpush1.msra.mxu0 0.0
    %291 = vmatprep.subr.mxu0 0.0
    %292 = vmatpush1.msra.mxu0 0.0
    %293 = vmatprep.subr.mxu0 0.0
    %294 = vmatpush1.msra.mxu0 0.0
    %295 = vmatprep.subr.mxu0 0.0
    %296 = vmatpush1.msra.mxu0 0.0
    %297 = vmatprep.subr.mxu0 0.0
    %298 = vmatpush1.msra.mxu0 0.0
    %299 = vmatprep.subr.mxu0 0.0
    %300 = vmatpush1.msra.mxu0 0.0
    %301 = vmatprep.subr.mxu0 0.0
    %302 = vmatpush1.msra.mxu0 0.0
    %303 = vmatprep.subr.mxu0 0.0
    %304 = vmatpush1.msra.mxu0 0.0
    %305 = vmatprep.subr.mxu0 0.0
    %306 = vmatpush1.msra.mxu0 0.0
    %307 = vmatprep.subr.mxu0 0.0
    %308 = vmatpush1.msra.mxu0 0.0
    %309 = vmatprep.subr.mxu0 0.0
    %310 = vmatpush1.msra.mxu0 0.0
    %311 = vmatprep.subr.mxu0 0.0
    %312 = vmatpush1.msra.mxu0 0.0
    %313 = vmatprep.mubr.f32.mxu0 0.0
    %314 = vmatmul.mubr.f32.gmra.mrb[0].mxu0 %v247
    %v315 = vpop.f32.mrb[0].mxu0
    %v316 = vadd.f32 0.0, %v315
    %v317 = vpop.f32.mrb[0].mxu0
    %318 = vdwg.mxu0
    %v320 = vrot.slane %v316, 6
    %v322 = vadd.f32 %v137, %v320
    %v323 = vxor.u32 %v322, 2147483648
    %v324 = vmul.f32 %v323, 1.442695
    %v325 = vpow.pop %v324
    %v326 = vadd.f32 %v325, 1.0
    %v327 = vrcp.pop %v326
    %v328 = vmul.f32 1.0, %v327
    %v329 = vtanh.pop %v322
    %v331 = vrot.slane %v234, 6
    %v333 = vmul.f32 %v328, %v331
    %335 = vrot.lane.b32.xlu0 %v329, 64
    %v336 = vpop.permute.xlu0 %335
    %v338 = vmul.f32 %v328, %v336
    %340 = vrot.lane.b32.xlu0 %v338, 32
    %v341 = vpop.permute.xlu0 %340
    %v343 = vadd.f32 %v333, %v341
    %v344 = vtanh.pop %v343
    %346 = vrot.lane.b32.xlu0 %v344, 64
    %v347 = vpop.permute.xlu0 %346
    %v349 = vmul.f32 %v328, %v347
    %351 = vrot.lane.b32.xlu0 %v349, 32
    %v352 = vpop.permute.xlu0 %351
    %vm354 = vcmask 257026
    %355 = vst.msk [vmem:[#allocation2] sm:$0xc] %vm354, %v352
    %v356 = vrot.slane %v349, 2
    %357 = vrot.lane.b32.xlu0 %v356, 32
    %v358 = vpop.permute.xlu0 %357
    %v359 = vsel %vm48, %v358, 0
    %361 = vmatprep.subr.mxu0 0.0
    %362 = vmatpush1.msra.mxu0 %v139
    %363 = vmatprep.subr.mxu0 0.0
    %364 = vmatpush1.msra.mxu0 %v140
    %365 = vmatprep.subr.mxu0 0.0
    %366 = vmatpush1.msra.mxu0 %v141
    %367 = vmatprep.subr.mxu0 0.0
    %368 = vmatpush1.msra.mxu0 %v142
    %369 = vmatprep.subr.mxu0 0.0
    %370 = vmatpush1.msra.mxu0 0.0
    %371 = vmatprep.subr.mxu0 0.0
    %372 = vmatpush1.msra.mxu0 0.0
    %373 = vmatprep.subr.mxu0 0.0
    %374 = vmatpush1.msra.mxu0 0.0
    %375 = vmatprep.subr.mxu0 0.0
    %376 = vmatpush1.msra.mxu0 0.0
    %377 = vmatprep.subr.mxu0 0.0
    %378 = vmatpush1.msra.mxu0 0.0
    %379 = vmatprep.subr.mxu0 0.0
    %380 = vmatpush1.msra.mxu0 0.0
    %381 = vmatprep.subr.mxu0 0.0
    %382 = vmatpush1.msra.mxu0 0.0
    %383 = vmatprep.subr.mxu0 0.0
    %384 = vmatpush1.msra.mxu0 0.0
    %385 = vmatprep.subr.mxu0 0.0
    %386 = vmatpush1.msra.mxu0 0.0
    %387 = vmatprep.subr.mxu0 0.0
    %388 = vmatpush1.msra.mxu0 0.0
    %389 = vmatprep.subr.mxu0 0.0
    %390 = vmatpush1.msra.mxu0 0.0
    %391 = vmatprep.subr.mxu0 0.0
    %392 = vmatpush1.msra.mxu0 0.0
    %393 = vmatprep.subr.mxu0 0.0
    %394 = vmatpush1.msra.mxu0 0.0
    %395 = vmatprep.subr.mxu0 0.0
    %396 = vmatpush1.msra.mxu0 0.0
    %397 = vmatprep.subr.mxu0 0.0
    %398 = vmatpush1.msra.mxu0 0.0
    %399 = vmatprep.subr.mxu0 0.0
    %400 = vmatpush1.msra.mxu0 0.0
    %401 = vmatprep.subr.mxu0 0.0
    %402 = vmatpush1.msra.mxu0 0.0
    %403 = vmatprep.subr.mxu0 0.0
    %404 = vmatpush1.msra.mxu0 0.0
    %405 = vmatprep.subr.mxu0 0.0
    %406 = vmatpush1.msra.mxu0 0.0
    %407 = vmatprep.subr.mxu0 0.0
    %408 = vmatpush1.msra.mxu0 0.0
    %409 = vmatprep.subr.mxu0 0.0
    %410 = vmatpush1.msra.mxu0 0.0
    %411 = vmatprep.subr.mxu0 0.0
    %412 = vmatpush1.msra.mxu0 0.0
    %413 = vmatprep.subr.mxu0 0.0
    %414 = vmatpush1.msra.mxu0 0.0
    %415 = vmatprep.subr.mxu0 0.0
    %416 = vmatpush1.msra.mxu0 0.0
    %417 = vmatprep.subr.mxu0 0.0
    %418 = vmatpush1.msra.mxu0 0.0
    %419 = vmatprep.subr.mxu0 0.0
    %420 = vmatpush1.msra.mxu0 0.0
    %421 = vmatprep.subr.mxu0 0.0
    %422 = vmatpush1.msra.mxu0 0.0
    %423 = vmatprep.subr.mxu0 0.0
    %424 = vmatpush1.msra.mxu0 0.0
    %425 = vmatprep.mubr.f32.mxu0 0.0
    %426 = vmatmul.mubr.f32.gmra.mrb[0].mxu0 %v359
    %v427 = vpop.f32.mrb[0].mxu0
    %v428 = vadd.f32 0.0, %v427
    %v429 = vpop.f32.mrb[0].mxu0
    %430 = vdwg.mxu0
    %v432 = vrot.slane %v428, 4
    %v434 = vadd.f32 %v137, %v432
    %v435 = vxor.u32 %v434, 2147483648
    %v436 = vmul.f32 %v435, 1.442695
    %v437 = vpow.pop %v436
    %v438 = vadd.f32 %v437, 1.0
    %v439 = vrcp.pop %v438
    %v440 = vmul.f32 1.0, %v439
    %v441 = vtanh.pop %v434
    %v443 = vrot.slane %v343, 6
    %v445 = vmul.f32 %v440, %v443
    %447 = vrot.lane.b32.xlu0 %v441, 64
    %v448 = vpop.permute.xlu0 %447
    %v450 = vmul.f32 %v440, %v448
    %452 = vrot.lane.b32.xlu0 %v450, 32
    %v453 = vpop.permute.xlu0 %452
    %v455 = vadd.f32 %v445, %v453
    %v456 = vtanh.pop %v455
    %458 = vrot.lane.b32.xlu0 %v456, 64
    %v459 = vpop.permute.xlu0 %458
    %v461 = vmul.f32 %v440, %v459
    %463 = vrot.lane.b32.xlu0 %v461, 32
    %v464 = vpop.permute.xlu0 %463
    %vm466 = vcmask 259076
    %467 = vst.msk [vmem:[#allocation2] sm:$0x30] %vm466, %v464
    %v468 = vrot.slane %v461, 4
    %469 = vrot.lane.b32.xlu0 %v468, 32
    %v470 = vpop.permute.xlu0 %469
    %v471 = vsel %vm48, %v470, 0
    %473 = vmatprep.subr.mxu0 0.0
    %474 = vmatpush1.msra.mxu0 %v139
    %475 = vmatprep.subr.mxu0 0.0
    %476 = vmatpush1.msra.mxu0 %v140
    %477 = vmatprep.subr.mxu0 0.0
    %478 = vmatpush1.msra.mxu0 %v141
    %479 = vmatprep.subr.mxu0 0.0
    %480 = vmatpush1.msra.mxu0 %v142
    %481 = vmatprep.subr.mxu0 0.0
    %482 = vmatpush1.msra.mxu0 0.0
    %483 = vmatprep.subr.mxu0 0.0
    %484 = vmatpush1.msra.mxu0 0.0
    %485 = vmatprep.subr.mxu0 0.0
    %486 = vmatpush1.msra.mxu0 0.0
    %487 = vmatprep.subr.mxu0 0.0
    %488 = vmatpush1.msra.mxu0 0.0
    %489 = vmatprep.subr.mxu0 0.0
    %490 = vmatpush1.msra.mxu0 0.0
    %491 = vmatprep.subr.mxu0 0.0
    %492 = vmatpush1.msra.mxu0 0.0
    %493 = vmatprep.subr.mxu0 0.0
    %494 = vmatpush1.msra.mxu0 0.0
    %495 = vmatprep.subr.mxu0 0.0
    %496 = vmatpush1.msra.mxu0 0.0
    %497 = vmatprep.subr.mxu0 0.0
    %498 = vmatpush1.msra.mxu0 0.0
    %499 = vmatprep.subr.mxu0 0.0
    %500 = vmatpush1.msra.mxu0 0.0
    %501 = vmatprep.subr.mxu0 0.0
    %502 = vmatpush1.msra.mxu0 0.0
    %503 = vmatprep.subr.mxu0 0.0
    %504 = vmatpush1.msra.mxu0 0.0
    %505 = vmatprep.subr.mxu0 0.0
    %506 = vmatpush1.msra.mxu0 0.0
    %507 = vmatprep.subr.mxu0 0.0
    %508 = vmatpush1.msra.mxu0 0.0
    %509 = vmatprep.subr.mxu0 0.0
    %510 = vmatpush1.msra.mxu0 0.0
    %511 = vmatprep.subr.mxu0 0.0
    %512 = vmatpush1.msra.mxu0 0.0
    %513 = vmatprep.subr.mxu0 0.0
    %514 = vmatpush1.msra.mxu0 0.0
    %515 = vmatprep.subr.mxu0 0.0
    %516 = vmatpush1.msra.mxu0 0.0
    %517 = vmatprep.subr.mxu0 0.0
    %518 = vmatpush1.msra.mxu0 0.0
    %519 = vmatprep.subr.mxu0 0.0
    %520 = vmatpush1.msra.mxu0 0.0
    %521 = vmatprep.subr.mxu0 0.0
    %522 = vmatpush1.msra.mxu0 0.0
    %523 = vmatprep.subr.mxu0 0.0
    %524 = vmatpush1.msra.mxu0 0.0
    %525 = vmatprep.subr.mxu0 0.0
    %526 = vmatpush1.msra.mxu0 0.0
    %527 = vmatprep.subr.mxu0 0.0
    %528 = vmatpush1.msra.mxu0 0.0
    %529 = vmatprep.subr.mxu0 0.0
    %530 = vmatpush1.msra.mxu0 0.0
    %531 = vmatprep.subr.mxu0 0.0
    %532 = vmatpush1.msra.mxu0 0.0
    %533 = vmatprep.subr.mxu0 0.0
    %534 = vmatpush1.msra.mxu0 0.0
    %535 = vmatprep.subr.mxu0 0.0
    %536 = vmatpush1.msra.mxu0 0.0
    %537 = vmatprep.mubr.f32.mxu0 0.0
    %538 = vmatmul.mubr.f32.gmra.mrb[0].mxu0 %v471
    %v539 = vpop.f32.mrb[0].mxu0
    %v540 = vadd.f32 0.0, %v539
    %v541 = vpop.f32.mrb[0].mxu0
    %542 = vdwg.mxu0
    %v544 = vrot.slane %v540, 2
    %v546 = vadd.f32 %v137, %v544
    %v547 = vxor.u32 %v546, 2147483648
    %v548 = vmul.f32 %v547, 1.442695
    %v549 = vpow.pop %v548
    %v550 = vadd.f32 %v549, 1.0
    %v551 = vrcp.pop %v550
    %v552 = vmul.f32 1.0, %v551
    %v553 = vtanh.pop %v546
    %v555 = vrot.slane %v455, 6
    %v557 = vmul.f32 %v552, %v555
    %559 = vrot.lane.b32.xlu0 %v553, 64
    %v560 = vpop.permute.xlu0 %559
    %v562 = vmul.f32 %v552, %v560
    %564 = vrot.lane.b32.xlu0 %v562, 32
    %v565 = vpop.permute.xlu0 %564
    %v567 = vadd.f32 %v557, %v565
    %v568 = vtanh.pop %v567
    %570 = vrot.lane.b32.xlu0 %v568, 64
    %v571 = vpop.permute.xlu0 %570
    %v573 = vmul.f32 %v552, %v571
    %575 = vrot.lane.b32.xlu0 %v573, 32
    %v576 = vpop.permute.xlu0 %575
    %vm578 = vcmask 261126
    %579 = vst.msk [vmem:[#allocation2] sm:$0xc0] %vm578, %v576
    %v580 = vrot.slane %v573, 6
    %581 = vrot.lane.b32.xlu0 %v580, 32
    %v582 = vpop.permute.xlu0 %581
    %v583 = vsel %vm48, %v582, 0
    %585 = vmatprep.subr.mxu0 0.0
    %586 = vmatpush1.msra.mxu0 %v139
    %587 = vmatprep.subr.mxu0 0.0
    %588 = vmatpush1.msra.mxu0 %v140
    %589 = vmatprep.subr.mxu0 0.0
    %590 = vmatpush1.msra.mxu0 %v141
    %591 = vmatprep.subr.mxu0 0.0
    %592 = vmatpush1.msra.mxu0 %v142
    %593 = vmatprep.subr.mxu0 0.0
    %594 = vmatpush1.msra.mxu0 0.0
    %595 = vmatprep.subr.mxu0 0.0
    %596 = vmatpush1.msra.mxu0 0.0
    %597 = vmatprep.subr.mxu0 0.0
    %598 = vmatpush1.msra.mxu0 0.0
    %599 = vmatprep.subr.mxu0 0.0
    %600 = vmatpush1.msra.mxu0 0.0
    %601 = vmatprep.subr.mxu0 0.0
    %602 = vmatpush1.msra.mxu0 0.0
    %603 = vmatprep.subr.mxu0 0.0
    %604 = vmatpush1.msra.mxu0 0.0
    %605 = vmatprep.subr.mxu0 0.0
    %606 = vmatpush1.msra.mxu0 0.0
    %607 = vmatprep.subr.mxu0 0.0
    %608 = vmatpush1.msra.mxu0 0.0
    %609 = vmatprep.subr.mxu0 0.0
    %610 = vmatpush1.msra.mxu0 0.0
    %611 = vmatprep.subr.mxu0 0.0
    %612 = vmatpush1.msra.mxu0 0.0
    %613 = vmatprep.subr.mxu0 0.0
    %614 = vmatpush1.msra.mxu0 0.0
    %615 = vmatprep.subr.mxu0 0.0
    %616 = vmatpush1.msra.mxu0 0.0
    %617 = vmatprep.subr.mxu0 0.0
    %618 = vmatpush1.msra.mxu0 0.0
    %619 = vmatprep.subr.mxu0 0.0
    %620 = vmatpush1.msra.mxu0 0.0
    %621 = vmatprep.subr.mxu0 0.0
    %622 = vmatpush1.msra.mxu0 0.0
    %623 = vmatprep.subr.mxu0 0.0
    %624 = vmatpush1.msra.mxu0 0.0
    %625 = vmatprep.subr.mxu0 0.0
    %626 = vmatpush1.msra.mxu0 0.0
    %627 = vmatprep.subr.mxu0 0.0
    %628 = vmatpush1.msra.mxu0 0.0
    %629 = vmatprep.subr.mxu0 0.0
    %630 = vmatpush1.msra.mxu0 0.0
    %631 = vmatprep.subr.mxu0 0.0
    %632 = vmatpush1.msra.mxu0 0.0
    %633 = vmatprep.subr.mxu0 0.0
    %634 = vmatpush1.msra.mxu0 0.0
    %635 = vmatprep.subr.mxu0 0.0
    %636 = vmatpush1.msra.mxu0 0.0
    %637 = vmatprep.subr.mxu0 0.0
    %638 = vmatpush1.msra.mxu0 0.0
    %639 = vmatprep.subr.mxu0 0.0
    %640 = vmatpush1.msra.mxu0 0.0
    %641 = vmatprep.subr.mxu0 0.0
    %642 = vmatpush1.msra.mxu0 0.0
    %643 = vmatprep.subr.mxu0 0.0
    %644 = vmatpush1.msra.mxu0 0.0
    %645 = vmatprep.subr.mxu0 0.0
    %646 = vmatpush1.msra.mxu0 0.0
    %647 = vmatprep.subr.mxu0 0.0
    %648 = vmatpush1.msra.mxu0 0.0
    %649 = vmatprep.mubr.f32.mxu0 0.0
    %650 = vmatmul.mubr.f32.gmra.mrb[0].mxu0 %v583
    %v651 = vpop.f32.mrb[0].mxu0
    %v652 = vadd.f32 0.0, %v651
    %v653 = vpop.f32.mrb[0].mxu0
    %654 = vdwg.mxu0
    %v655 = vadd.f32 %v138, %v652
    %v656 = vxor.u32 %v655, 2147483648
    %v657 = vmul.f32 %v656, 1.442695
    %v658 = vpow.pop %v657
    %v659 = vadd.f32 %v658, 1.0
    %v660 = vrcp.pop %v659
    %v661 = vmul.f32 1.0, %v660
    %v662 = vtanh.pop %v655
    %v664 = vrot.slane %v567, 6
    %v666 = vmul.f32 %v661, %v664
    %668 = vrot.lane.b32.xlu0 %v662, 64
    %v669 = vpop.permute.xlu0 %668
    %v671 = vmul.f32 %v661, %v669
    %673 = vrot.lane.b32.xlu0 %v671, 32
    %v674 = vpop.permute.xlu0 %673
    %v676 = vadd.f32 %v666, %v674
    %v677 = vtanh.pop %v676
    %679 = vrot.lane.b32.xlu0 %v677, 64
    %v680 = vpop.permute.xlu0 %679
    %v682 = vmul.f32 %v661, %v680
    %684 = vrot.lane.b32.xlu0 %v682, 32
    %v685 = vpop.permute.xlu0 %684
    %687 = vst.msk [vmem:[#allocation2 + $0x8] sm:$0x3] %vm245, %v685
    %v688 = vsel %vm48, %v685, 0
    %690 = vmatprep.subr.mxu0 0.0
    %691 = vmatpush1.msra.mxu0 %v139
    %692 = vmatprep.subr.mxu0 0.0
    %693 = vmatpush1.msra.mxu0 %v140
    %694 = vmatprep.subr.mxu0 0.0
    %695 = vmatpush1.msra.mxu0 %v141
    %696 = vmatprep.subr.mxu0 0.0
    %697 = vmatpush1.msra.mxu0 %v142
    %698 = vmatprep.subr.mxu0 0.0
    %699 = vmatpush1.msra.mxu0 0.0
    %700 = vmatprep.subr.mxu0 0.0
    %701 = vmatpush1.msra.mxu0 0.0
    %702 = vmatprep.subr.mxu0 0.0
    %703 = vmatpush1.msra.mxu0 0.0
    %704 = vmatprep.subr.mxu0 0.0
    %705 = vmatpush1.msra.mxu0 0.0
    %706 = vmatprep.subr.mxu0 0.0
    %707 = vmatpush1.msra.mxu0 0.0
    %708 = vmatprep.subr.mxu0 0.0
    %709 = vmatpush1.msra.mxu0 0.0
    %710 = vmatprep.subr.mxu0 0.0
    %711 = vmatpush1.msra.mxu0 0.0
    %712 = vmatprep.subr.mxu0 0.0
    %713 = vmatpush1.msra.mxu0 0.0
    %714 = vmatprep.subr.mxu0 0.0
    %715 = vmatpush1.msra.mxu0 0.0
    %716 = vmatprep.subr.mxu0 0.0
    %717 = vmatpush1.msra.mxu0 0.0
    %718 = vmatprep.subr.mxu0 0.0
    %719 = vmatpush1.msra.mxu0 0.0
    %720 = vmatprep.subr.mxu0 0.0
    %721 = vmatpush1.msra.mxu0 0.0
    %722 = vmatprep.subr.mxu0 0.0
    %723 = vmatpush1.msra.mxu0 0.0
    %724 = vmatprep.subr.mxu0 0.0
    %725 = vmatpush1.msra.mxu0 0.0
    %726 = vmatprep.subr.mxu0 0.0
    %727 = vmatpush1.msra.mxu0 0.0
    %728 = vmatprep.subr.mxu0 0.0
    %729 = vmatpush1.msra.mxu0 0.0
    %730 = vmatprep.subr.mxu0 0.0
    %731 = vmatpush1.msra.mxu0 0.0
    %732 = vmatprep.subr.mxu0 0.0
    %733 = vmatpush1.msra.mxu0 0.0
    %734 = vmatprep.subr.mxu0 0.0
    %735 = vmatpush1.msra.mxu0 0.0
    %736 = vmatprep.subr.mxu0 0.0
    %737 = vmatpush1.msra.mxu0 0.0
    %738 = vmatprep.subr.mxu0 0.0
    %739 = vmatpush1.msra.mxu0 0.0
    %740 = vmatprep.subr.mxu0 0.0
    %741 = vmatpush1.msra.mxu0 0.0
    %742 = vmatprep.subr.mxu0 0.0
    %743 = vmatpush1.msra.mxu0 0.0
    %744 = vmatprep.subr.mxu0 0.0
    %745 = vmatpush1.msra.mxu0 0.0
    %746 = vmatprep.subr.mxu0 0.0
    %747 = vmatpush1.msra.mxu0 0.0
    %748 = vmatprep.subr.mxu0 0.0
    %749 = vmatpush1.msra.mxu0 0.0
    %750 = vmatprep.subr.mxu0 0.0
    %751 = vmatpush1.msra.mxu0 0.0
    %752 = vmatprep.subr.mxu0 0.0
    %753 = vmatpush1.msra.mxu0 0.0
    %754 = vmatprep.mubr.f32.mxu0 0.0
    %755 = vmatmul.mubr.f32.gmra.mrb[0].mxu0 %v688
    %v756 = vpop.f32.mrb[0].mxu0
    %v757 = vadd.f32 0.0, %v756
    %v758 = vpop.f32.mrb[0].mxu0
    %759 = vdwg.mxu0
    %v761 = vrot.slane %v757, 6
    %v763 = vadd.f32 %v138, %v761
    %v764 = vxor.u32 %v763, 2147483648
    %v765 = vmul.f32 %v764, 1.442695
    %v766 = vpow.pop %v765
    %v767 = vadd.f32 %v766, 1.0
    %v768 = vrcp.pop %v767
    %v769 = vmul.f32 1.0, %v768
    %v770 = vtanh.pop %v763
    %v772 = vrot.slane %v676, 6
    %v774 = vmul.f32 %v769, %v772
    %776 = vrot.lane.b32.xlu0 %v770, 64
    %v777 = vpop.permute.xlu0 %776
    %v779 = vmul.f32 %v769, %v777
    %781 = vrot.lane.b32.xlu0 %v779, 32
    %v782 = vpop.permute.xlu0 %781
    %v784 = vadd.f32 %v774, %v782
    %v785 = vtanh.pop %v784
    %787 = vrot.lane.b32.xlu0 %v785, 64
    %v788 = vpop.permute.xlu0 %787
    %v790 = vmul.f32 %v769, %v788
    %792 = vrot.lane.b32.xlu0 %v790, 32
    %v793 = vpop.permute.xlu0 %792
    %795 = vst.msk [vmem:[#allocation2 + $0x8] sm:$0xc] %vm354, %v793
    %v796 = vrot.slane %v790, 2
    %797 = vrot.lane.b32.xlu0 %v796, 32
    %v798 = vpop.permute.xlu0 %797
    %v799 = vsel %vm48, %v798, 0
    %801 = vmatprep.subr.mxu0 0.0
    %802 = vmatpush1.msra.mxu0 %v139
    %803 = vmatprep.subr.mxu0 0.0
    %804 = vmatpush1.msra.mxu0 %v140
    %805 = vmatprep.subr.mxu0 0.0
    %806 = vmatpush1.msra.mxu0 %v141
    %807 = vmatprep.subr.mxu0 0.0
    %808 = vmatpush1.msra.mxu0 %v142
    %809 = vmatprep.subr.mxu0 0.0
    %810 = vmatpush1.msra.mxu0 0.0
    %811 = vmatprep.subr.mxu0 0.0
    %812 = vmatpush1.msra.mxu0 0.0
    %813 = vmatprep.subr.mxu0 0.0
    %814 = vmatpush1.msra.mxu0 0.0
    %815 = vmatprep.subr.mxu0 0.0
    %816 = vmatpush1.msra.mxu0 0.0
    %817 = vmatprep.subr.mxu0 0.0
    %818 = vmatpush1.msra.mxu0 0.0
    %819 = vmatprep.subr.mxu0 0.0
    %820 = vmatpush1.msra.mxu0 0.0
    %821 = vmatprep.subr.mxu0 0.0
    %822 = vmatpush1.msra.mxu0 0.0
    %823 = vmatprep.subr.mxu0 0.0
    %824 = vmatpush1.msra.mxu0 0.0
    %825 = vmatprep.subr.mxu0 0.0
    %826 = vmatpush1.msra.mxu0 0.0
    %827 = vmatprep.subr.mxu0 0.0
    %828 = vmatpush1.msra.mxu0 0.0
    %829 = vmatprep.subr.mxu0 0.0
    %830 = vmatpush1.msra.mxu0 0.0
    %831 = vmatprep.subr.mxu0 0.0
    %832 = vmatpush1.msra.mxu0 0.0
    %833 = vmatprep.subr.mxu0 0.0
    %834 = vmatpush1.msra.mxu0 0.0
    %835 = vmatprep.subr.mxu0 0.0
    %836 = vmatpush1.msra.mxu0 0.0
    %837 = vmatprep.subr.mxu0 0.0
    %838 = vmatpush1.msra.mxu0 0.0
    %839 = vmatprep.subr.mxu0 0.0
    %840 = vmatpush1.msra.mxu0 0.0
    %841 = vmatprep.subr.mxu0 0.0
    %842 = vmatpush1.msra.mxu0 0.0
    %843 = vmatprep.subr.mxu0 0.0
    %844 = vmatpush1.msra.mxu0 0.0
    %845 = vmatprep.subr.mxu0 0.0
    %846 = vmatpush1.msra.mxu0 0.0
    %847 = vmatprep.subr.mxu0 0.0
    %848 = vmatpush1.msra.mxu0 0.0
    %849 = vmatprep.subr.mxu0 0.0
    %850 = vmatpush1.msra.mxu0 0.0
    %851 = vmatprep.subr.mxu0 0.0
    %852 = vmatpush1.msra.mxu0 0.0
    %853 = vmatprep.subr.mxu0 0.0
    %854 = vmatpush1.msra.mxu0 0.0
    %855 = vmatprep.subr.mxu0 0.0
    %856 = vmatpush1.msra.mxu0 0.0
    %857 = vmatprep.subr.mxu0 0.0
    %858 = vmatpush1.msra.mxu0 0.0
    %859 = vmatprep.subr.mxu0 0.0
    %860 = vmatpush1.msra.mxu0 0.0
    %861 = vmatprep.subr.mxu0 0.0
    %862 = vmatpush1.msra.mxu0 0.0
    %863 = vmatprep.subr.mxu0 0.0
    %864 = vmatpush1.msra.mxu0 0.0
    %865 = vmatprep.mubr.f32.mxu0 0.0
    %866 = vmatmul.mubr.f32.gmra.mrb[0].mxu0 %v799
    %v867 = vpop.f32.mrb[0].mxu0
    %v868 = vadd.f32 0.0, %v867
    %v869 = vpop.f32.mrb[0].mxu0
    %870 = vdwg.mxu0
    %v872 = vrot.slane %v868, 4
    %v874 = vadd.f32 %v138, %v872
    %v875 = vxor.u32 %v874, 2147483648
    %v876 = vmul.f32 %v875, 1.442695
    %v877 = vpow.pop %v876
    %v878 = vadd.f32 %v877, 1.0
    %v879 = vrcp.pop %v878
    %v880 = vmul.f32 1.0, %v879
    %v881 = vtanh.pop %v874
    %v883 = vrot.slane %v784, 6
    %v885 = vmul.f32 %v880, %v883
    %887 = vrot.lane.b32.xlu0 %v881, 64
    %v888 = vpop.permute.xlu0 %887
    %v890 = vmul.f32 %v880, %v888
    %892 = vrot.lane.b32.xlu0 %v890, 32
    %v893 = vpop.permute.xlu0 %892
    %v895 = vadd.f32 %v885, %v893
    %v896 = vtanh.pop %v895
    %898 = vrot.lane.b32.xlu0 %v896, 64
    %v899 = vpop.permute.xlu0 %898
    %v901 = vmul.f32 %v880, %v899
    %903 = vrot.lane.b32.xlu0 %v901, 32
    %v904 = vpop.permute.xlu0 %903
    %906 = vst.msk [vmem:[#allocation2 + $0x8] sm:$0x30] %vm466, %v904
    %v907 = vrot.slane %v901, 4
    %908 = vrot.lane.b32.xlu0 %v907, 32
    %v909 = vpop.permute.xlu0 %908
    %v910 = vsel %vm48, %v909, 0
    %912 = vmatprep.subr.mxu0 0.0
    %913 = vmatpush1.msra.mxu0 %v139
    %914 = vmatprep.subr.mxu0 0.0
    %915 = vmatpush1.msra.mxu0 %v140
    %916 = vmatprep.subr.mxu0 0.0
    %917 = vmatpush1.msra.mxu0 %v141
    %918 = vmatprep.subr.mxu0 0.0
    %919 = vmatpush1.msra.mxu0 %v142
    %920 = vmatprep.subr.mxu0 0.0
    %921 = vmatpush1.msra.mxu0 0.0
    %922 = vmatprep.subr.mxu0 0.0
    %923 = vmatpush1.msra.mxu0 0.0
    %924 = vmatprep.subr.mxu0 0.0
    %925 = vmatpush1.msra.mxu0 0.0
    %926 = vmatprep.subr.mxu0 0.0
    %927 = vmatpush1.msra.mxu0 0.0
    %928 = vmatprep.subr.mxu0 0.0
    %929 = vmatpush1.msra.mxu0 0.0
    %930 = vmatprep.subr.mxu0 0.0
    %931 = vmatpush1.msra.mxu0 0.0
    %932 = vmatprep.subr.mxu0 0.0
    %933 = vmatpush1.msra.mxu0 0.0
    %934 = vmatprep.subr.mxu0 0.0
    %935 = vmatpush1.msra.mxu0 0.0
    %936 = vmatprep.subr.mxu0 0.0
    %937 = vmatpush1.msra.mxu0 0.0
    %938 = vmatprep.subr.mxu0 0.0
    %939 = vmatpush1.msra.mxu0 0.0
    %940 = vmatprep.subr.mxu0 0.0
    %941 = vmatpush1.msra.mxu0 0.0
    %942 = vmatprep.subr.mxu0 0.0
    %943 = vmatpush1.msra.mxu0 0.0
    %944 = vmatprep.subr.mxu0 0.0
    %945 = vmatpush1.msra.mxu0 0.0
    %946 = vmatprep.subr.mxu0 0.0
    %947 = vmatpush1.msra.mxu0 0.0
    %948 = vmatprep.subr.mxu0 0.0
    %949 = vmatpush1.msra.mxu0 0.0
    %950 = vmatprep.subr.mxu0 0.0
    %951 = vmatpush1.msra.mxu0 0.0
    %952 = vmatprep.subr.mxu0 0.0
    %953 = vmatpush1.msra.mxu0 0.0
    %954 = vmatprep.subr.mxu0 0.0
    %955 = vmatpush1.msra.mxu0 0.0
    %956 = vmatprep.subr.mxu0 0.0
    %957 = vmatpush1.msra.mxu0 0.0
    %958 = vmatprep.subr.mxu0 0.0
    %959 = vmatpush1.msra.mxu0 0.0
    %960 = vmatprep.subr.mxu0 0.0
    %961 = vmatpush1.msra.mxu0 0.0
    %962 = vmatprep.subr.mxu0 0.0
    %963 = vmatpush1.msra.mxu0 0.0
    %964 = vmatprep.subr.mxu0 0.0
    %965 = vmatpush1.msra.mxu0 0.0
    %966 = vmatprep.subr.mxu0 0.0
    %967 = vmatpush1.msra.mxu0 0.0
    %968 = vmatprep.subr.mxu0 0.0
    %969 = vmatpush1.msra.mxu0 0.0
    %970 = vmatprep.subr.mxu0 0.0
    %971 = vmatpush1.msra.mxu0 0.0
    %972 = vmatprep.subr.mxu0 0.0
    %973 = vmatpush1.msra.mxu0 0.0
    %974 = vmatprep.subr.mxu0 0.0
    %975 = vmatpush1.msra.mxu0 0.0
    %976 = vmatprep.mubr.f32.mxu0 0.0
    %977 = vmatmul.mubr.f32.gmra.mrb[0].mxu0 %v910
    %v978 = vpop.f32.mrb[0].mxu0
    %v979 = vadd.f32 0.0, %v978
    %v980 = vpop.f32.mrb[0].mxu0
    %981 = vdwg.mxu0
    %v983 = vrot.slane %v979, 2
    %v985 = vadd.f32 %v138, %v983
    %v986 = vxor.u32 %v985, 2147483648
    %v987 = vmul.f32 %v986, 1.442695
    %v988 = vpow.pop %v987
    %v989 = vadd.f32 %v988, 1.0
    %v990 = vrcp.pop %v989
    %v991 = vmul.f32 1.0, %v990
    %v992 = vtanh.pop %v985
    %v994 = vrot.slane %v895, 6
    %v996 = vmul.f32 %v991, %v994
    %998 = vrot.lane.b32.xlu0 %v992, 64
    %v999 = vpop.permute.xlu0 %998
    %v1001 = vmul.f32 %v991, %v999
    %1003 = vrot.lane.b32.xlu0 %v1001, 32
    %v1004 = vpop.permute.xlu0 %1003
    %v1006 = vadd.f32 %v996, %v1004
    %v1007 = vtanh.pop %v1006
    %1009 = vrot.lane.b32.xlu0 %v1007, 64
    %v1010 = vpop.permute.xlu0 %1009
    %v1012 = vmul.f32 %v991, %v1010
    %1014 = vrot.lane.b32.xlu0 %v1012, 32
    %v1015 = vpop.permute.xlu0 %1014
    %1017 = vst.msk [vmem:[#allocation2 + $0x8] sm:$0xc0] %vm578, %v1015
    %v1018 = vld [vmem:[#allocation2] sm:$0xff]
    %v1019 = vld [vmem:[#allocation2 + $0x8] sm:$0xff]
    %v1020 = vld [vmem:[%s3] sm:$0xff]
    %v1021 = vld [vmem:[%s3 + $0x8] sm:$0xff]
    %v1022 = vmul.f32 %v1018, %v1020
    %v1023 = vmul.f32 %v1019, %v1021
    %v1024 = vld [vmem:[%s8] sm:$0xff]
    %v1025 = vld [vmem:[%s8 + $0x8] sm:$0xff]
    %v1026 = vld [vmem:[%s8 + $0x10] sm:$0xff]
    %v1027 = vld [vmem:[%s8 + $0x18] sm:$0xff]
    %v1028 = vld [vmem:[%s4] sm:$0xff]
    %v1029 = vld [vmem:[%s4 + $0x8] sm:$0xff]
    %v1031 = vsel %vm48, %v1022, 0
    %v1034 = vsel %vm48, %v1023, 0
    %1036 = vmatprep.subr.mxu0 0.0
    %1037 = vmatpush1.msra.mxu0 %v1024
    %1038 = vmatprep.subr.mxu0 0.0
    %1039 = vmatpush1.msra.mxu0 %v1025
    %1040 = vmatprep.subr.mxu0 0.0
    %1041 = vmatpush1.msra.mxu0 %v1026
    %1042 = vmatprep.subr.mxu0 0.0
    %1043 = vmatpush1.msra.mxu0 %v1027
    %1044 = vmatprep.subr.mxu0 0.0
    %1045 = vmatpush1.msra.mxu0 0.0
    %1046 = vmatprep.subr.mxu0 0.0
    %1047 = vmatpush1.msra.mxu0 0.0
    %1048 = vmatprep.subr.mxu0 0.0
    %1049 = vmatpush1.msra.mxu0 0.0
    %1050 = vmatprep.subr.mxu0 0.0
    %1051 = vmatpush1.msra.mxu0 0.0
    %1052 = vmatprep.subr.mxu0 0.0
    %1053 = vmatpush1.msra.mxu0 0.0
    %1054 = vmatprep.subr.mxu0 0.0
    %1055 = vmatpush1.msra.mxu0 0.0
    %1056 = vmatprep.subr.mxu0 0.0
    %1057 = vmatpush1.msra.mxu0 0.0
    %1058 = vmatprep.subr.mxu0 0.0
    %1059 = vmatpush1.msra.mxu0 0.0
    %1060 = vmatprep.subr.mxu0 0.0
    %1061 = vmatpush1.msra.mxu0 0.0
    %1062 = vmatprep.subr.mxu0 0.0
    %1063 = vmatpush1.msra.mxu0 0.0
    %1064 = vmatprep.subr.mxu0 0.0
    %1065 = vmatpush1.msra.mxu0 0.0
    %1066 = vmatprep.subr.mxu0 0.0
    %1067 = vmatpush1.msra.mxu0 0.0
    %1068 = vmatprep.subr.mxu0 0.0
    %1069 = vmatpush1.msra.mxu0 0.0
    %1070 = vmatprep.subr.mxu0 0.0
    %1071 = vmatpush1.msra.mxu0 0.0
    %1072 = vmatprep.subr.mxu0 0.0
    %1073 = vmatpush1.msra.mxu0 0.0
    %1074 = vmatprep.subr.mxu0 0.0
    %1075 = vmatpush1.msra.mxu0 0.0
    %1076 = vmatprep.subr.mxu0 0.0
    %1077 = vmatpush1.msra.mxu0 0.0
    %1078 = vmatprep.subr.mxu0 0.0
    %1079 = vmatpush1.msra.mxu0 0.0
    %1080 = vmatprep.subr.mxu0 0.0
    %1081 = vmatpush1.msra.mxu0 0.0
    %1082 = vmatprep.subr.mxu0 0.0
    %1083 = vmatpush1.msra.mxu0 0.0
    %1084 = vmatprep.subr.mxu0 0.0
    %1085 = vmatpush1.msra.mxu0 0.0
    %1086 = vmatprep.subr.mxu0 0.0
    %1087 = vmatpush1.msra.mxu0 0.0
    %1088 = vmatprep.subr.mxu0 0.0
    %1089 = vmatpush1.msra.mxu0 0.0
    %1090 = vmatprep.subr.mxu0 0.0
    %1091 = vmatpush1.msra.mxu0 0.0
    %1092 = vmatprep.subr.mxu0 0.0
    %1093 = vmatpush1.msra.mxu0 0.0
    %1094 = vmatprep.subr.mxu0 0.0
    %1095 = vmatpush1.msra.mxu0 0.0
    %1096 = vmatprep.subr.mxu0 0.0
    %1097 = vmatpush1.msra.mxu0 0.0
    %1098 = vmatprep.subr.mxu0 0.0
    %1099 = vmatpush1.msra.mxu0 0.0
    %1100 = vmatprep.mubr.f32.mxu0 0.0
    %1101 = vmatmul.mubr.f32.gmra.mrb[0].mxu0 %v1031
    %v1102 = vpop.f32.mrb[0].mxu0
    %v1103 = vadd.f32 %v1028, %v1102
    %v1104 = vpop.f32.mrb[0].mxu0
    %1105 = vmatprep.mubr.f32.mxu0 0.0
    %1106 = vmatmul.mubr.f32.gmra.mrb[0].mxu0 %v1034
    %v1107 = vpop.f32.mrb[0].mxu0
    %v1108 = vadd.f32 %v1029, %v1107
    %v1109 = vpop.f32.mrb[0].mxu0
    %1110 = vdwg.mxu0
    %v1111 = vld [vmem:[%s9] sm:$0x1]
    %v1113 = vlaneseq
    %v1114 = vshrl.u32 %v1113, 7
    %v1115 = vsub.s32 0, %v1114
    %v1116 = vrot.slane %v1111, %v1115
    %v1118 = vadd.f32 %v1103, %v1116
    %v1119 = vadd.f32 %v1108, %v1116
    %v1120 = vxor.u32 %v1118, 2147483648
    %v1121 = vxor.u32 %v1119, 2147483648
    %v1122 = vmul.f32 %v1120, 1.442695
    %v1123 = vpow.pop %v1122
    %v1124 = vmul.f32 %v1121, 1.442695
    %v1125 = vpow.pop %v1124
    %v1126 = vadd.f32 %v1123, 1.0
    %v1127 = vadd.f32 %v1125, 1.0
    %v1128 = vrcp.pop %v1126
    %v1129 = vmul.f32 1.0, %v1128
    %v1130 = vrcp.pop %v1127
    %v1131 = vmul.f32 1.0, %v1130
    %1132 = vst [vmem:[#allocation3] sm:$0xff] %v1129
    %1133 = vst [vmem:[#allocation3 + $0x8] sm:$0xff] %v1131
    // Predicated region
    $region42: #{dkt_forget_forward.1} parent=1 // pred_check
      _
    $region43: #{dkt_forget_forward.1} parent=1 // pred_check_branch
      %1135 = sbr.rel (0) target = $region45
    $region44: #{dkt_forget_forward.1} parent=1 // pred_region
      %s1137 = ssub.s32 256, 256
      %1138 = vsyncadd [#allocation4], %s1137
      %s1139 = sshll.u32 [#allocation3], 4
      %s1140 = int_to_ptr.vmem [resolvable:$true] %s1139
      %1145 = dma.vmem_to_hbm [thread:$0]  %s1140, 256, %s10, [#allocation4], 128, 128, 8
    $region45: #{dkt_forget_forward.1} parent=1 // pred_fallthru
      _
    // Predicated region
    $region46: #{dkt_forget_forward.1} parent=1 // pred_check
      _
    $region47: #{dkt_forget_forward.1} parent=1 // pred_check_branch
      %1147 = sbr.rel (0) target = $region49
    $region48: #{dkt_forget_forward.1} parent=1 // pred_region
      %1148 = dma.done [#allocation4], 256
    $region49: #{dkt_forget_forward.1} parent=1 // pred_fallthru
      _
    %1149 = vsyncpa [#allocation4], 1

</llo_original>
